<compile_context>
chip_gen: v6e
topology: v6e:2x2x1
jax: 0.10.0
libtpu: 0.0.40
codegen_flags: <defaults>
</compile_context>

<pallas_src>
import jax
import jax.numpy as jnp
from jax import lax
from jax.experimental import pallas as pl
from jax.experimental.pallas import tpu as pltpu


def _round_up(x, m):
    return (x + m - 1) // m * m


def _padded_vmem_bytes(shape, dtype):
    """Padded VMEM footprint of a >=2-D block (sublane x 128-lane tiling)."""
    itemsize = jnp.dtype(dtype).itemsize
    sub = 8 * max(1, 4 // itemsize)          # 8 rows f32, 16 bf16, 32 int8
    lead = 1
    for d in shape[:-2]:
        lead *= int(d)
    return lead * _round_up(int(shape[-2]), sub) * _round_up(int(shape[-1]), 128) * itemsize


def _device_kind():
    try:
        return jax.devices()[0].device_kind.lower()
    except Exception:
        return ""


def _make_attn_clf_kernel(valid_s, s_blk, needs_mask, upcast_x):
    """One (batch-tile i, seq-tile k) step of the online-softmax attention pooler."""

    def kernel(x_ref, attn_w_ref, w1t_ref, b1_ref, w2t_ref, b2_ref,
               clf_w_ref, clf_b_ref, out_ref, m_sc, l_sc, ctx_sc):
        k = pl.program_id(1)

        @pl.when(k == 0)
        def _init():
            m_sc[...] = jnp.full_like(m_sc, -jnp.inf)
            l_sc[...] = jnp.zeros_like(l_sc)
            ctx_sc[...] = jnp.zeros_like(ctx_sc)

        Sb, Bt, _H = x_ref.shape
        xs = x_ref[...]                                   # (Sb, Bt, H)
        if upcast_x:
            xs = xs.astype(jnp.float32)                   # v5e has no bf16 VALU
        aw = attn_w_ref[...].astype(xs.dtype)             # (1, H)

        # Attention scores for this sequence block: VPU multiply + lane reduce (a 1-column
        # MXU matmul would waste the MXU). Bias dropped: softmax(x + c) == softmax(x).
        s = jnp.sum((xs * aw[None, :, :]).astype(jnp.float32), axis=-1)   # (Sb, Bt)
        if needs_mask:
            row = k * s_blk + lax.broadcasted_iota(jnp.int32, (Sb, Bt), 0)
            s = jnp.where(row < valid_s, s, -jnp.inf)     # zero-padded seq rows

        # Online-softmax accumulation; normalization folded into the final scale.
        m_prev = m_sc[...]                                                # (1, Bt)
        m_new = jnp.maximum(m_prev, jnp.max(s, axis=0, keepdims=True))
        alpha = jnp.exp(m_prev - m_new)                                   # (1, Bt)
        p = jnp.exp(s - m_new)                                            # (Sb, Bt)
        l_sc[...] = alpha * l_sc[...] + jnp.sum(p, axis=0, keepdims=True)
        ctx_sc[...] = (alpha.reshape(Bt, 1) * ctx_sc[...]
                       + jnp.sum((p.astype(xs.dtype)[:, :, None] * xs).astype(jnp.float32),
                                 axis=0))
        m_sc[...] = m_new

        # TODO(synk): training-mode dropout would mask ctx/h1/h2 here via pltpu.prng_*.
        @pl.when(k == pl.num_programs(1) - 1)
        def _finalize():
            inv_l = pl.reciprocal(l_sc[...], approx=False)                # exact, (1, Bt)
            ctx = ctx_sc[...] * inv_l.reshape(Bt, 1)                      # (Bt, H)
            h1 = jnp.dot(ctx, w1t_ref[...], preferred_element_type=jnp.float32) + b1_ref[...]
            h1 = jnp.where(h1 > 0, h1, 0.01 * h1)                         # LeakyReLU(0.01)
            h2 = jnp.dot(h1, w2t_ref[...], preferred_element_type=jnp.float32) + b2_ref[...]
            h2 = jnp.where(h2 > 0, h2, 0.01 * h2)
            # Final Linear(H/2 -> 1): VPU multiply + lane reduce, lane-dense (1,1,Bt) store.
            logits = jnp.sum(h2 * clf_w_ref[...], axis=-1) + clf_b_ref[0]
            out_ref[...] = logits.reshape(1, 1, Bt).astype(out_ref.dtype)

    return kernel


def attn_single_target_clf(encoder_outputs, params, *, block_b=None, block_s=None):
    """encoder_outputs: (S, B, H), like the PyTorch module. Returns logits (B,) float32."""
    S, B, H = encoder_outputs.shape
    Hh = H // 2
    x = encoder_outputs
    x_itemsize = jnp.dtype(x.dtype).itemsize
    x_sub = 8 * max(1, 4 // x_itemsize)
    h_lanes = _round_up(H, 128)

    # ---- generation-aware budgets ---------------------------------------------------------
    kind = _device_kind()
    is_v7ish = ("v7" in kind) or not any(t in kind for t in ("v5", "v6"))
    has_bf16_vpu = any(t in kind for t in ("v6", "v7"))
    if is_v7ish:                       # v7x: 64 MiB VMEM/TC (unknown parts: conservative too)
        vmem_limit = 48 * 1024 * 1024
        gen_x_cap = int(3.5 * 1024 * 1024)
        force_two_batch_tiles = True   # >=2 batch tiles -> both v7x TensorCores
    else:                              # v5e / v6e: 128 MiB physical VMEM
        vmem_limit = 80 * 1024 * 1024
        gen_x_cap = 10 * 1024 * 1024
        force_two_batch_tiles = False

    # Padding-aware footprint of the VMEM-resident (single-buffered) weight blocks.
    resident_w = (_padded_vmem_bytes((1, H), jnp.float32)        # attn_w
                  + _padded_vmem_bytes((H, H), jnp.float32)      # w1t
                  + _padded_vmem_bytes((1, H), jnp.float32)      # b1
                  + _padded_vmem_bytes((H, Hh), jnp.float32)     # w2t
                  + _padded_vmem_bytes((1, Hh), jnp.float32)     # b2
                  + _padded_vmem_bytes((1, Hh), jnp.float32))    # clf_w
    headroom = 4 * 1024 * 1024
    avail = max(1 * 1024 * 1024, vmem_limit - resident_w - headroom)
    # Budget per x block: 2 pipeline buffers + ~2 block-sized in-kernel f32 temporaries.
    x_cap = max(256 * 1024, min(gen_x_cap, avail // 4))

    # ---- batch tile -------------------------------------------------------------------------
    b_pad8 = _round_up(max(B, 1), 8)
    if block_b is None:
        bb = min(b_pad8, 512)
        while bb > 8 and 8 * _round_up(bb, x_sub) * h_lanes * x_itemsize > x_cap:
            bb -= 8                    # at least 8 sequence rows must fit the x-block cap
        if force_two_batch_tiles and b_pad8 >= 16:
            bb = min(bb, max(8, (b_pad8 // 2) // 8 * 8))
        block_b = bb
    else:
        block_b = max(8, _round_up(block_b, 8))
    block_b = min(block_b, b_pad8)
    b_pad = _round_up(B, block_b)
    n_b_tiles = b_pad // block_b

    # ---- sequence tile (online-softmax grid axis) -------------------------------------------
    row_bytes = _round_up(block_b, x_sub) * h_lanes * x_itemsize
    if block_s is None:
        s_blk = max(8, (x_cap // row_bytes) // 8 * 8)
    else:
        s_blk = max(8, _round_up(block_s, 8))
    s_blk = min(s_blk, _round_up(S, 8))
    s_pad = _round_up(S, s_blk)
    n_s_tiles = s_pad // s_blk
    needs_mask = s_pad != S            # zero-padded sequence rows are masked to -inf

    if s_pad != S or b_pad != B:       # padded batch columns are sliced off below
        x = jnp.pad(x, ((0, s_pad - S), (0, b_pad - B), (0, 0)))

    # bf16 VPU math on v6e/v7x; keep the f32 upcast on v5e / unknown parts.
    upcast_x = not (jnp.dtype(x.dtype) == jnp.float32
                    or (jnp.dtype(x.dtype) == jnp.bfloat16 and has_bf16_vpu))

    # Pre-transpose MLP weights so the kernel does plain row-major x @ W_t (glue only).
    attn_w = jnp.asarray(params["attn_w"], jnp.float32).reshape(1, H)
    w1t = jnp.asarray(params["w1"], jnp.float32).T                 # (H, H)
    b1 = jnp.asarray(params["b1"], jnp.float32).reshape(1, H)
    w2t = jnp.asarray(params["w2"], jnp.float32).T                 # (H, Hh)
    b2 = jnp.asarray(params["b2"], jnp.float32).reshape(1, Hh)
    clf_w = jnp.asarray(params["clf_w"], jnp.float32).reshape(1, Hh)
    clf_b = jnp.asarray(params["clf_b"], jnp.float32).reshape(1,)  # scalar -> SMEM

    kernel = _make_attn_clf_kernel(S, s_blk, needs_mask, upcast_x)

    def _weight_spec(shape, mode):
        if mode is None:
            return pl.BlockSpec(shape, lambda i, k: (0, 0))
        return pl.BlockSpec(shape, lambda i, k: (0, 0), pipeline_mode=mode)

    def _run(weight_mode):
        return pl.pallas_call(
            kernel,
            out_shape=jax.ShapeDtypeStruct((n_b_tiles, 1, block_b), jnp.float32),
            grid=(n_b_tiles, n_s_tiles),
            in_specs=[
                # x: seq-major (s_blk, block_b, H) blocks straight from (S, B, H) (no transpose).
                pl.BlockSpec((s_blk, block_b, H), lambda i, k: (k, i, 0)),
                # weights/biases: constant index_map -> fetched once, VMEM-resident.
                _weight_spec((1, H), weight_mode),
                _weight_spec((H, H), weight_mode),
                _weight_spec((1, H), weight_mode),
                _weight_spec((H, Hh), weight_mode),
                _weight_spec((1, Hh), weight_mode),
                _weight_spec((1, Hh), weight_mode),
                pl.BlockSpec(memory_space=pltpu.MemorySpace.SMEM),   # clf bias scalar
            ],
            out_specs=pl.BlockSpec((1, 1, block_b), lambda i, k: (i, 0, 0)),  # lane-dense
            scratch_shapes=[
                pltpu.VMEM((1, block_b), jnp.float32),      # running max  m
                pltpu.VMEM((1, block_b), jnp.float32),      # running sum  l
                pltpu.VMEM((block_b, H), jnp.float32),      # unnormalized context
            ],
            compiler_params=pltpu.CompilerParams(
                dimension_semantics=("parallel", "arbitrary"),
                vmem_limit_bytes=vmem_limit,
            ),
        )(x, attn_w, w1t, b1, w2t, b2, clf_w, clf_b)

    try:
        # Weights single-buffered: no duplicated weight copies eating VMEM.
        out = _run(pl.Buffered(1))
    except Exception:
        # Fallback if this runtime rejects single-buffered pipeline_mode.
        out = _run(None)

    return out.reshape(-1)[:B]


def _reference_forward(encoder_outputs, p):
    """Plain-JAX mirror of the PyTorch forward (eval mode), for verification."""
    aw = encoder_outputs @ p["attn_w"].T + p["attn_b"]            # (S, B, 1)
    aw = jnp.squeeze(aw, axis=-1).T                               # (B, S)
    aw = jax.nn.softmax(aw, axis=1)[:, None, :]                   # (B, 1, S)
    enc_t = jnp.transpose(encoder_outputs, (1, 0, 2))             # (B, S, H)
    ctx = jnp.squeeze(aw @ enc_t, axis=1)                         # (B, H)
    h1 = jax.nn.leaky_relu(ctx @ p["w1"].T + p["b1"], 0.01)
    h2 = jax.nn.leaky_relu(h1 @ p["w2"].T + p["b2"], 0.01)
    return jnp.squeeze(h2 @ p["clf_w"].T + p["clf_b"], axis=-1)   # (B,)


def _init_params(key, hidden_size):
    Hh = hidden_size // 2
    ks = jax.random.split(key, 8)
    scale = 0.1
    return {
        "attn_w": scale * jax.random.normal(ks[0], (1, hidden_size), jnp.float32),
        "attn_b": scale * jax.random.normal(ks[1], (1,), jnp.float32),
        "w1": scale * jax.random.normal(ks[2], (hidden_size, hidden_size), jnp.float32),
        "b1": scale * jax.random.normal(ks[3], (hidden_size,), jnp.float32),
        "w2": scale * jax.random.normal(ks[4], (Hh, hidden_size), jnp.float32),
        "b2": scale * jax.random.normal(ks[5], (Hh,), jnp.float32),
        "clf_w": scale * jax.random.normal(ks[6], (1, Hh), jnp.float32),
        "clf_b": scale * jax.random.normal(ks[7], (1,), jnp.float32),
    }


if __name__ == "__main__":
    S, B, H = 20, 16, 32
    key = jax.random.PRNGKey(0)
    k_x, k_p = jax.random.split(key)
    encoder_outputs = jax.random.normal(k_x, (S, B, H), jnp.float32)
    params = _init_params(k_p, H)

    ref = _reference_forward(encoder_outputs, params)

    # Forced small tiles: 2 batch tiles x 3 sequence tiles -> exercises the online-softmax
    # accumulator, padded-row masking (S=20 -> S_pad=24) and megacore batch parallelism.
    logits = attn_single_target_clf(encoder_outputs, params, block_b=8, block_s=8)
    logits = jax.block_until_ready(logits)
    assert logits.shape == (B,), logits.shape
    assert jnp.allclose(logits, ref, atol=1e-3, rtol=1e-3), (logits, ref)

    # Auto tiling (generation- and VMEM-budget-aware heuristic).
    logits_auto = jax.block_until_ready(attn_single_target_clf(encoder_outputs, params))
    assert jnp.allclose(logits_auto, ref, atol=1e-3, rtol=1e-3), (logits_auto, ref)

    print("KERNEL_OK")
</pallas_src>

<mosaic_0001>
module attributes {stable_mosaic.version = 11 : i64} {
  func.func @kernel(%arg0: i32, %arg1: i32, %arg2: memref<8x8x32xf32, #tpu.memory_space<vmem>>, %arg3: memref<1x32xf32, #tpu.memory_space<vmem>>, %arg4: memref<32x32xf32, #tpu.memory_space<vmem>>, %arg5: memref<1x32xf32, #tpu.memory_space<vmem>>, %arg6: memref<32x16xf32, #tpu.memory_space<vmem>>, %arg7: memref<1x16xf32, #tpu.memory_space<vmem>>, %arg8: memref<1x16xf32, #tpu.memory_space<vmem>>, %arg9: memref<1xf32, #tpu.memory_space<smem>>, %arg10: memref<1x1x8xf32, #tpu.memory_space<vmem>>, %arg11: memref<1x8xf32, #tpu.memory_space<vmem>>, %arg12: memref<1x8xf32, #tpu.memory_space<vmem>>, %arg13: memref<8x32xf32, #tpu.memory_space<vmem>>) attributes {dimension_semantics = [#tpu.dimension_semantics<parallel>, #tpu.dimension_semantics<arbitrary>], iteration_bounds = array<i64: 2, 3>, scalar_prefetch = 0 : i64, scratch_operands = 3 : i64, tpu.core_type = #tpu.core_type<tc>, window_params = [{transform_indices = @transform_0, window_bounds = array<i64: 8, 8, 32>}, {pipeline_mode = #tpu.pipeline_mode<synchronous>, transform_indices = @transform_1, window_bounds = array<i64: 1, 32>}, {pipeline_mode = #tpu.pipeline_mode<synchronous>, transform_indices = @transform_2, window_bounds = array<i64: 32, 32>}, {pipeline_mode = #tpu.pipeline_mode<synchronous>, transform_indices = @transform_3, window_bounds = array<i64: 1, 32>}, {pipeline_mode = #tpu.pipeline_mode<synchronous>, transform_indices = @transform_4, window_bounds = array<i64: 32, 16>}, {pipeline_mode = #tpu.pipeline_mode<synchronous>, transform_indices = @transform_5, window_bounds = array<i64: 1, 16>}, {pipeline_mode = #tpu.pipeline_mode<synchronous>, transform_indices = @transform_6, window_bounds = array<i64: 1, 16>}, {transform_indices = @transform_7, window_bounds = array<i64: 1>}, {transform_indices = @transform_8, window_bounds = array<i64: 1, 1, 8>}]} {
    %c0_i32 = arith.constant 0 : i32
    %0 = arith.cmpi eq, %arg1, %c0_i32 : i32
    %1 = arith.extui %0 : i1 to i32
    %c0_i32_0 = arith.constant 0 : i32
    %2 = arith.cmpi ne, %1, %c0_i32_0 : i32
    scf.if %2 {
      %cst_22 = arith.constant 0xFF800000 : f32
      %46 = vector.broadcast %cst_22 : f32 to vector<1x8xf32>
      %c0_23 = arith.constant 0 : index
      %c0_24 = arith.constant 0 : index
      %47 = vector.load %arg11[%c0_23, %c0_24] : memref<1x8xf32, #tpu.memory_space<vmem>>, vector<1x8xf32>
      tpu.vector_store %arg11[%c0_23, %c0_24], %46 {strides = array<i32>} : memref<1x8xf32, #tpu.memory_space<vmem>>, vector<1x8xf32>,
      %cst_25 = arith.constant 0.000000e+00 : f32
      %48 = vector.broadcast %cst_25 : f32 to vector<1x8xf32>
      %c0_26 = arith.constant 0 : index
      %c0_27 = arith.constant 0 : index
      %49 = vector.load %arg12[%c0_26, %c0_27] : memref<1x8xf32, #tpu.memory_space<vmem>>, vector<1x8xf32>
      tpu.vector_store %arg12[%c0_26, %c0_27], %48 {strides = array<i32>} : memref<1x8xf32, #tpu.memory_space<vmem>>, vector<1x8xf32>,
      %cst_28 = arith.constant 0.000000e+00 : f32
      %50 = vector.broadcast %cst_28 : f32 to vector<8x32xf32>
      %c0_29 = arith.constant 0 : index
      %c0_30 = arith.constant 0 : index
      %51 = vector.load %arg13[%c0_29, %c0_30] : memref<8x32xf32, #tpu.memory_space<vmem>>, vector<8x32xf32>
      tpu.vector_store %arg13[%c0_29, %c0_30], %50 {strides = array<i32>} : memref<8x32xf32, #tpu.memory_space<vmem>>, vector<8x32xf32>,
    } else {
    }
    %c0 = arith.constant 0 : index
    %c0_1 = arith.constant 0 : index
    %c0_2 = arith.constant 0 : index
    %3 = vector.load %arg2[%c0, %c0_1, %c0_2] : memref<8x8x32xf32, #tpu.memory_space<vmem>>, vector<8x8x32xf32>
    %c0_3 = arith.constant 0 : index
    %c0_4 = arith.constant 0 : index
    %4 = vector.load %arg3[%c0_3, %c0_4] : memref<1x32xf32, #tpu.memory_space<vmem>>, vector<1x32xf32>
    %5 = vector.shape_cast %4 : vector<1x32xf32> to vector<1x1x32xf32>
    %6 = vector.broadcast %5 : vector<1x1x32xf32> to vector<8x8x32xf32>
    %7 = arith.mulf %3, %6 : vector<8x8x32xf32>
    %cst = arith.constant dense<0.000000e+00> : vector<8x8xf32>
    %8 = vector.multi_reduction <add>, %7, %cst [2] : vector<8x8x32xf32> to vector<8x8xf32>
    %c8_i32 = arith.constant 8 : i32
    %9 = arith.muli %arg1, %c8_i32 : i32
    %10 = tpu.iota {dimensions = array<i32: 0>} : vector<8x8xi32>
    %11 = vector.broadcast %9 : i32 to vector<8x8xi32>
    %12 = arith.addi %11, %10 : vector<8x8xi32>
    %c20_i32 = arith.constant 20 : i32
    %13 = vector.broadcast %c20_i32 : i32 to vector<8x8xi32>
    %14 = arith.cmpi slt, %12, %13 : vector<8x8xi32>
    %cst_5 = arith.constant 0xFF800000 : f32
    %15 = vector.broadcast %cst_5 : f32 to vector<8x8xf32>
    %16 = arith.select %14, %8, %15 : vector<8x8xi1>, vector<8x8xf32>
    %c0_6 = arith.constant 0 : index
    %c0_7 = arith.constant 0 : index
    %17 = vector.load %arg11[%c0_6, %c0_7] : memref<1x8xf32, #tpu.memory_space<vmem>>, vector<1x8xf32>
    %cst_8 = arith.constant dense<0xFF800000> : vector<8xf32>
    %18 = vector.multi_reduction <maximumf>, %16, %cst_8 [0] : vector<8x8xf32> to vector<8xf32>
    %19 = vector.shape_cast %18 : vector<8xf32> to vector<1x8xf32>
    %20 = arith.maximumf %17, %19 : vector<1x8xf32>
    %21 = arith.subf %17, %20 : vector<1x8xf32>
    %22 = math.exp %21 : vector<1x8xf32>
    %23 = vector.broadcast %20 : vector<1x8xf32> to vector<8x8xf32>
    %24 = arith.subf %16, %23 : vector<8x8xf32>
    %25 = math.exp %24 : vector<8x8xf32>
    %c0_9 = arith.constant 0 : index
    %c0_10 = arith.constant 0 : index
    %26 = vector.load %arg12[%c0_9, %c0_10] : memref<1x8xf32, #tpu.memory_space<vmem>>, vector<1x8xf32>
    %27 = arith.mulf %22, %26 : vector<1x8xf32>
    %cst_11 = arith.constant dense<0.000000e+00> : vector<8xf32>
    %28 = vector.multi_reduction <add>, %25, %cst_11 [0] : vector<8x8xf32> to vector<8xf32>
    %29 = vector.shape_cast %28 : vector<8xf32> to vector<1x8xf32>
    %30 = arith.addf %27, %29 : vector<1x8xf32>
    %c0_12 = arith.constant 0 : index
    %c0_13 = arith.constant 0 : index
    %31 = vector.load %arg12[%c0_12, %c0_13] : memref<1x8xf32, #tpu.memory_space<vmem>>, vector<1x8xf32>
    tpu.vector_store %arg12[%c0_12, %c0_13], %30 {strides = array<i32>} : memref<1x8xf32, #tpu.memory_space<vmem>>, vector<1x8xf32>,
    %32 = vector.shape_cast %22 : vector<1x8xf32> to vector<8x1xf32>
    %c0_14 = arith.constant 0 : index
    %c0_15 = arith.constant 0 : index
    %33 = vector.load %arg13[%c0_14, %c0_15] : memref<8x32xf32, #tpu.memory_space<vmem>>, vector<8x32xf32>
    %34 = vector.broadcast %32 : vector<8x1xf32> to vector<8x32xf32>
    %35 = arith.mulf %34, %33 : vector<8x32xf32>
    %36 = vector.shape_cast %25 : vector<8x8xf32> to vector<8x8x1xf32>
    %37 = vector.broadcast %36 : vector<8x8x1xf32> to vector<8x8x32xf32>
    %38 = arith.mulf %37, %3 : vector<8x8x32xf32>
    %cst_16 = arith.constant dense<0.000000e+00> : vector<8x32xf32>
    %39 = vector.multi_reduction <add>, %38, %cst_16 [0] : vector<8x8x32xf32> to vector<8x32xf32>
    %40 = arith.addf %35, %39 : vector<8x32xf32>
    %c0_17 = arith.constant 0 : index
    %c0_18 = arith.constant 0 : index
    %41 = vector.load %arg13[%c0_17, %c0_18] : memref<8x32xf32, #tpu.memory_space<vmem>>, vector<8x32xf32>
    tpu.vector_store %arg13[%c0_17, %c0_18], %40 {strides = array<i32>} : memref<8x32xf32, #tpu.memory_space<vmem>>, vector<8x32xf32>,
    %c0_19 = arith.constant 0 : index
    %c0_20 = arith.constant 0 : index
    %42 = vector.load %arg11[%c0_19, %c0_20] : memref<1x8xf32, #tpu.memory_space<vmem>>, vector<1x8xf32>
    tpu.vector_store %arg11[%c0_19, %c0_20], %20 {strides = array<i32>} : memref<1x8xf32, #tpu.memory_space<vmem>>, vector<1x8xf32>,
    %c2_i32 = arith.constant 2 : i32
    %43 = arith.cmpi eq, %arg1, %c2_i32 : i32
    %44 = arith.extui %43 : i1 to i32
    %c0_i32_21 = arith.constant 0 : i32
    %45 = arith.cmpi ne, %44, %c0_i32_21 : i32
    scf.if %45 {
      %c0_22 = arith.constant 0 : index
      %c0_23 = arith.constant 0 : index
      %46 = vector.load %arg12[%c0_22, %c0_23] : memref<1x8xf32, #tpu.memory_space<vmem>>, vector<1x8xf32>
      %47 = tpu.reciprocal %46 : vector<1x8xf32> -> vector<1x8xf32>
      %c0_24 = arith.constant 0 : index
      %c0_25 = arith.constant 0 : index
      %48 = vector.load %arg13[%c0_24, %c0_25] : memref<8x32xf32, #tpu.memory_space<vmem>>, vector<8x32xf32>
      %49 = vector.shape_cast %47 : vector<1x8xf32> to vector<8x1xf32>
      %50 = vector.broadcast %49 : vector<8x1xf32> to vector<8x32xf32>
      %51 = arith.mulf %48, %50 : vector<8x32xf32>
      %c0_26 = arith.constant 0 : index
      %c0_27 = arith.constant 0 : index
      %52 = vector.load %arg4[%c0_26, %c0_27] : memref<32x32xf32, #tpu.memory_space<vmem>>, vector<32x32xf32>
      %cst_28 = arith.constant dense<0.000000e+00> : vector<8x32xf32>
      %53 = tpu.matmul %51, %52, %cst_28 {dimension_numbers = #tpu.dot_dimension_numbers<[1], [0], [0], [1], [0, 0, 1, 1], [], []>} : vector<8x32xf32>, vector<32x32xf32>, vector<8x32xf32> -> vector<8x32xf32>
      %c0_29 = arith.constant 0 : index
      %c0_30 = arith.constant 0 : index
      %54 = vector.load %arg5[%c0_29, %c0_30] : memref<1x32xf32, #tpu.memory_space<vmem>>, vector<1x32xf32>
      %55 = vector.broadcast %54 : vector<1x32xf32> to vector<8x32xf32>
      %56 = arith.addf %53, %55 : vector<8x32xf32>
      %cst_31 = arith.constant 0.000000e+00 : f32
      %57 = vector.broadcast %cst_31 : f32 to vector<8x32xf32>
      %58 = arith.cmpf ogt, %56, %57 : vector<8x32xf32>
      %cst_32 = arith.constant 0.00999999977 : f32
      %59 = vector.broadcast %cst_32 : f32 to vector<8x32xf32>
      %60 = arith.mulf %59, %56 : vector<8x32xf32>
      %61 = arith.select %58, %56, %60 : vector<8x32xi1>, vector<8x32xf32>
      %c0_33 = arith.constant 0 : index
      %c0_34 = arith.constant 0 : index
      %62 = vector.load %arg6[%c0_33, %c0_34] : memref<32x16xf32, #tpu.memory_space<vmem>>, vector<32x16xf32>
      %cst_35 = arith.constant dense<0.000000e+00> : vector<8x16xf32>
      %63 = tpu.matmul %61, %62, %cst_35 {dimension_numbers = #tpu.dot_dimension_numbers<[1], [0], [0], [1], [0, 0, 1, 1], [], []>} : vector<8x32xf32>, vector<32x16xf32>, vector<8x16xf32> -> vector<8x16xf32>
      %c0_36 = arith.constant 0 : index
      %c0_37 = arith.constant 0 : index
      %64 = vector.load %arg7[%c0_36, %c0_37] : memref<1x16xf32, #tpu.memory_space<vmem>>, vector<1x16xf32>
      %65 = vector.broadcast %64 : vector<1x16xf32> to vector<8x16xf32>
      %66 = arith.addf %63, %65 : vector<8x16xf32>
      %cst_38 = arith.constant 0.000000e+00 : f32
      %67 = vector.broadcast %cst_38 : f32 to vector<8x16xf32>
      %68 = arith.cmpf ogt, %66, %67 : vector<8x16xf32>
      %cst_39 = arith.constant 0.00999999977 : f32
      %69 = vector.broadcast %cst_39 : f32 to vector<8x16xf32>
      %70 = arith.mulf %69, %66 : vector<8x16xf32>
      %71 = arith.select %68, %66, %70 : vector<8x16xi1>, vector<8x16xf32>
      %c0_40 = arith.constant 0 : index
      %c0_41 = arith.constant 0 : index
      %72 = vector.load %arg8[%c0_40, %c0_41] : memref<1x16xf32, #tpu.memory_space<vmem>>, vector<1x16xf32>
      %73 = vector.broadcast %72 : vector<1x16xf32> to vector<8x16xf32>
      %74 = arith.mulf %71, %73 : vector<8x16xf32>
      %cst_42 = arith.constant dense<0.000000e+00> : vector<8xf32>
      %75 = vector.multi_reduction <add>, %74, %cst_42 [1] : vector<8x16xf32> to vector<8xf32>
      %c0_43 = arith.constant 0 : index
      %76 = memref.load %arg9[%c0_43] : memref<1xf32, #tpu.memory_space<smem>>
      %77 = vector.broadcast %76 : f32 to vector<8xf32>
      %78 = arith.addf %75, %77 : vector<8xf32>
      %79 = vector.shape_cast %78 : vector<8xf32> to vector<1x1x8xf32>
      %c0_44 = arith.constant 0 : index
      %c0_45 = arith.constant 0 : index
      %c0_46 = arith.constant 0 : index
      %80 = vector.load %arg10[%c0_44, %c0_45, %c0_46] : memref<1x1x8xf32, #tpu.memory_space<vmem>>, vector<1x1x8xf32>
      tpu.vector_store %arg10[%c0_44, %c0_45, %c0_46], %79 {strides = array<i32>} : memref<1x1x8xf32, #tpu.memory_space<vmem>>, vector<1x1x8xf32>,
    } else {
    }
    return
  }
  func.func @transform_0(%arg0: i32, %arg1: i32) -> (i32, i32, i32) {
    %c0_i32 = arith.constant 0 : i32
    %c0_i32_0 = arith.constant 0 : i32
    return %arg1, %arg0, %c0_i32 : i32, i32, i32
  }
  func.func @transform_1(%arg0: i32, %arg1: i32) -> (i32, i32) {
    %c0_i32 = arith.constant 0 : i32
    %c0_i32_0 = arith.constant 0 : i32
    %c0_i32_1 = arith.constant 0 : i32
    return %c0_i32, %c0_i32_0 : i32, i32
  }
  func.func @transform_2(%arg0: i32, %arg1: i32) -> (i32, i32) {
    %c0_i32 = arith.constant 0 : i32
    %c0_i32_0 = arith.constant 0 : i32
    %c0_i32_1 = arith.constant 0 : i32
    return %c0_i32, %c0_i32_0 : i32, i32
  }
  func.func @transform_3(%arg0: i32, %arg1: i32) -> (i32, i32) {
    %c0_i32 = arith.constant 0 : i32
    %c0_i32_0 = arith.constant 0 : i32
    %c0_i32_1 = arith.constant 0 : i32
    return %c0_i32, %c0_i32_0 : i32, i32
  }
  func.func @transform_4(%arg0: i32, %arg1: i32) -> (i32, i32) {
    %c0_i32 = arith.constant 0 : i32
    %c0_i32_0 = arith.constant 0 : i32
    %c0_i32_1 = arith.constant 0 : i32
    return %c0_i32, %c0_i32_0 : i32, i32
  }
  func.func @transform_5(%arg0: i32, %arg1: i32) -> (i32, i32) {
    %c0_i32 = arith.constant 0 : i32
    %c0_i32_0 = arith.constant 0 : i32
    %c0_i32_1 = arith.constant 0 : i32
    return %c0_i32, %c0_i32_0 : i32, i32
  }
  func.func @transform_6(%arg0: i32, %arg1: i32) -> (i32, i32) {
    %c0_i32 = arith.constant 0 : i32
    %c0_i32_0 = arith.constant 0 : i32
    %c0_i32_1 = arith.constant 0 : i32
    return %c0_i32, %c0_i32_0 : i32, i32
  }
  func.func @transform_7(%arg0: i32, %arg1: i32) -> i32 {
    %c0_i32 = arith.constant 0 : i32
    %c0_i32_0 = arith.constant 0 : i32
    return %c0_i32 : i32
  }
  func.func @transform_8(%arg0: i32, %arg1: i32) -> (i32, i32, i32) {
    %c0_i32 = arith.constant 0 : i32
    %c0_i32_0 = arith.constant 0 : i32
    %c0_i32_1 = arith.constant 0 : i32
    return %arg0, %c0_i32, %c0_i32_0 : i32, i32, i32
  }
}

module attributes {stable_mosaic.version = 11 : i64} {
  func.func @kernel(%arg0: i32, %arg1: i32, %arg2: memref<8x8x32xf32, #tpu.memory_space<vmem>>, %arg3: memref<1x32xf32, #tpu.memory_space<vmem>>, %arg4: memref<32x32xf32, #tpu.memory_space<vmem>>, %arg5: memref<1x32xf32, #tpu.memory_space<vmem>>, %arg6: memref<32x16xf32, #tpu.memory_space<vmem>>, %arg7: memref<1x16xf32, #tpu.memory_space<vmem>>, %arg8: memref<1x16xf32, #tpu.memory_space<vmem>>, %arg9: memref<1xf32, #tpu.memory_space<smem>>, %arg10: memref<1x1x8xf32, #tpu.memory_space<vmem>>, %arg11: memref<1x8xf32, #tpu.memory_space<vmem>>, %arg12: memref<1x8xf32, #tpu.memory_space<vmem>>, %arg13: memref<8x32xf32, #tpu.memory_space<vmem>>) attributes {dimension_semantics = [#tpu.dimension_semantics<parallel>, #tpu.dimension_semantics<arbitrary>], iteration_bounds = array<i64: 2, 3>, scalar_prefetch = 0 : i64, scratch_operands = 3 : i64, tpu.core_type = #tpu.core_type<tc>, window_params = [{transform_indices = @transform_0, window_bounds = array<i64: 8, 8, 32>}, {pipeline_mode = #tpu.pipeline_mode<synchronous>, transform_indices = @transform_1, window_bounds = array<i64: 1, 32>}, {pipeline_mode = #tpu.pipeline_mode<synchronous>, transform_indices = @transform_2, window_bounds = array<i64: 32, 32>}, {pipeline_mode = #tpu.pipeline_mode<synchronous>, transform_indices = @transform_3, window_bounds = array<i64: 1, 32>}, {pipeline_mode = #tpu.pipeline_mode<synchronous>, transform_indices = @transform_4, window_bounds = array<i64: 32, 16>}, {pipeline_mode = #tpu.pipeline_mode<synchronous>, transform_indices = @transform_5, window_bounds = array<i64: 1, 16>}, {pipeline_mode = #tpu.pipeline_mode<synchronous>, transform_indices = @transform_6, window_bounds = array<i64: 1, 16>}, {transform_indices = @transform_7, window_bounds = array<i64: 1>}, {transform_indices = @transform_8, window_bounds = array<i64: 1, 1, 8>}]} {
    %c0_i32 = arith.constant 0 : i32
    %0 = arith.cmpi eq, %arg1, %c0_i32 : i32
    %1 = arith.extui %0 : i1 to i32
    %c0_i32_0 = arith.constant 0 : i32
    %2 = arith.cmpi ne, %1, %c0_i32_0 : i32
    scf.if %2 {
      %cst_22 = arith.constant 0xFF800000 : f32
      %46 = vector.broadcast %cst_22 : f32 to vector<1x8xf32>
      %c0_23 = arith.constant 0 : index
      %c0_24 = arith.constant 0 : index
      %47 = vector.load %arg11[%c0_23, %c0_24] : memref<1x8xf32, #tpu.memory_space<vmem>>, vector<1x8xf32>
      tpu.vector_store %arg11[%c0_23, %c0_24], %46 {strides = array<i32>} : memref<1x8xf32, #tpu.memory_space<vmem>>, vector<1x8xf32>,
      %cst_25 = arith.constant 0.000000e+00 : f32
      %48 = vector.broadcast %cst_25 : f32 to vector<1x8xf32>
      %c0_26 = arith.constant 0 : index
      %c0_27 = arith.constant 0 : index
      %49 = vector.load %arg12[%c0_26, %c0_27] : memref<1x8xf32, #tpu.memory_space<vmem>>, vector<1x8xf32>
      tpu.vector_store %arg12[%c0_26, %c0_27], %48 {strides = array<i32>} : memref<1x8xf32, #tpu.memory_space<vmem>>, vector<1x8xf32>,
      %cst_28 = arith.constant 0.000000e+00 : f32
      %50 = vector.broadcast %cst_28 : f32 to vector<8x32xf32>
      %c0_29 = arith.constant 0 : index
      %c0_30 = arith.constant 0 : index
      %51 = vector.load %arg13[%c0_29, %c0_30] : memref<8x32xf32, #tpu.memory_space<vmem>>, vector<8x32xf32>
      tpu.vector_store %arg13[%c0_29, %c0_30], %50 {strides = array<i32>} : memref<8x32xf32, #tpu.memory_space<vmem>>, vector<8x32xf32>,
    } else {
    }
    %c0 = arith.constant 0 : index
    %c0_1 = arith.constant 0 : index
    %c0_2 = arith.constant 0 : index
    %3 = vector.load %arg2[%c0, %c0_1, %c0_2] : memref<8x8x32xf32, #tpu.memory_space<vmem>>, vector<8x8x32xf32>
    %c0_3 = arith.constant 0 : index
    %c0_4 = arith.constant 0 : index
    %4 = vector.load %arg3[%c0_3, %c0_4] : memref<1x32xf32, #tpu.memory_space<vmem>>, vector<1x32xf32>
    %5 = vector.shape_cast %4 : vector<1x32xf32> to vector<1x1x32xf32>
    %6 = vector.broadcast %5 : vector<1x1x32xf32> to vector<8x8x32xf32>
    %7 = arith.mulf %3, %6 : vector<8x8x32xf32>
    %cst = arith.constant dense<0.000000e+00> : vector<8x8xf32>
    %8 = vector.multi_reduction <add>, %7, %cst [2] : vector<8x8x32xf32> to vector<8x8xf32>
    %c8_i32 = arith.constant 8 : i32
    %9 = arith.muli %arg1, %c8_i32 : i32
    %10 = tpu.iota {dimensions = array<i32: 0>} : vector<8x8xi32>
    %11 = vector.broadcast %9 : i32 to vector<8x8xi32>
    %12 = arith.addi %11, %10 : vector<8x8xi32>
    %c20_i32 = arith.constant 20 : i32
    %13 = vector.broadcast %c20_i32 : i32 to vector<8x8xi32>
    %14 = arith.cmpi slt, %12, %13 : vector<8x8xi32>
    %cst_5 = arith.constant 0xFF800000 : f32
    %15 = vector.broadcast %cst_5 : f32 to vector<8x8xf32>
    %16 = arith.select %14, %8, %15 : vector<8x8xi1>, vector<8x8xf32>
    %c0_6 = arith.constant 0 : index
    %c0_7 = arith.constant 0 : index
    %17 = vector.load %arg11[%c0_6, %c0_7] : memref<1x8xf32, #tpu.memory_space<vmem>>, vector<1x8xf32>
    %cst_8 = arith.constant dense<0xFF800000> : vector<8xf32>
    %18 = vector.multi_reduction <maximumf>, %16, %cst_8 [0] : vector<8x8xf32> to vector<8xf32>
    %19 = vector.shape_cast %18 : vector<8xf32> to vector<1x8xf32>
    %20 = arith.maximumf %17, %19 : vector<1x8xf32>
    %21 = arith.subf %17, %20 : vector<1x8xf32>
    %22 = math.exp %21 : vector<1x8xf32>
    %23 = vector.broadcast %20 : vector<1x8xf32> to vector<8x8xf32>
    %24 = arith.subf %16, %23 : vector<8x8xf32>
    %25 = math.exp %24 : vector<8x8xf32>
    %c0_9 = arith.constant 0 : index
    %c0_10 = arith.constant 0 : index
    %26 = vector.load %arg12[%c0_9, %c0_10] : memref<1x8xf32, #tpu.memory_space<vmem>>, vector<1x8xf32>
    %27 = arith.mulf %22, %26 : vector<1x8xf32>
    %cst_11 = arith.constant dense<0.000000e+00> : vector<8xf32>
    %28 = vector.multi_reduction <add>, %25, %cst_11 [0] : vector<8x8xf32> to vector<8xf32>
    %29 = vector.shape_cast %28 : vector<8xf32> to vector<1x8xf32>
    %30 = arith.addf %27, %29 : vector<1x8xf32>
    %c0_12 = arith.constant 0 : index
    %c0_13 = arith.constant 0 : index
    %31 = vector.load %arg12[%c0_12, %c0_13] : memref<1x8xf32, #tpu.memory_space<vmem>>, vector<1x8xf32>
    tpu.vector_store %arg12[%c0_12, %c0_13], %30 {strides = array<i32>} : memref<1x8xf32, #tpu.memory_space<vmem>>, vector<1x8xf32>,
    %32 = vector.shape_cast %22 : vector<1x8xf32> to vector<8x1xf32>
    %c0_14 = arith.constant 0 : index
    %c0_15 = arith.constant 0 : index
    %33 = vector.load %arg13[%c0_14, %c0_15] : memref<8x32xf32, #tpu.memory_space<vmem>>, vector<8x32xf32>
    %34 = vector.broadcast %32 : vector<8x1xf32> to vector<8x32xf32>
    %35 = arith.mulf %34, %33 : vector<8x32xf32>
    %36 = vector.shape_cast %25 : vector<8x8xf32> to vector<8x8x1xf32>
    %37 = vector.broadcast %36 : vector<8x8x1xf32> to vector<8x8x32xf32>
    %38 = arith.mulf %37, %3 : vector<8x8x32xf32>
    %cst_16 = arith.constant dense<0.000000e+00> : vector<8x32xf32>
    %39 = vector.multi_reduction <add>, %38, %cst_16 [0] : vector<8x8x32xf32> to vector<8x32xf32>
    %40 = arith.addf %35, %39 : vector<8x32xf32>
    %c0_17 = arith.constant 0 : index
    %c0_18 = arith.constant 0 : index
    %41 = vector.load %arg13[%c0_17, %c0_18] : memref<8x32xf32, #tpu.memory_space<vmem>>, vector<8x32xf32>
    tpu.vector_store %arg13[%c0_17, %c0_18], %40 {strides = array<i32>} : memref<8x32xf32, #tpu.memory_space<vmem>>, vector<8x32xf32>,
    %c0_19 = arith.constant 0 : index
    %c0_20 = arith.constant 0 : index
    %42 = vector.load %arg11[%c0_19, %c0_20] : memref<1x8xf32, #tpu.memory_space<vmem>>, vector<1x8xf32>
    tpu.vector_store %arg11[%c0_19, %c0_20], %20 {strides = array<i32>} : memref<1x8xf32, #tpu.memory_space<vmem>>, vector<1x8xf32>,
    %c2_i32 = arith.constant 2 : i32
    %43 = arith.cmpi eq, %arg1, %c2_i32 : i32
    %44 = arith.extui %43 : i1 to i32
    %c0_i32_21 = arith.constant 0 : i32
    %45 = arith.cmpi ne, %44, %c0_i32_21 : i32
    scf.if %45 {
      %c0_22 = arith.constant 0 : index
      %c0_23 = arith.constant 0 : index
      %46 = vector.load %arg12[%c0_22, %c0_23] : memref<1x8xf32, #tpu.memory_space<vmem>>, vector<1x8xf32>
      %47 = tpu.reciprocal %46 : vector<1x8xf32> -> vector<1x8xf32>
      %c0_24 = arith.constant 0 : index
      %c0_25 = arith.constant 0 : index
      %48 = vector.load %arg13[%c0_24, %c0_25] : memref<8x32xf32, #tpu.memory_space<vmem>>, vector<8x32xf32>
      %49 = vector.shape_cast %47 : vector<1x8xf32> to vector<8x1xf32>
      %50 = vector.broadcast %49 : vector<8x1xf32> to vector<8x32xf32>
      %51 = arith.mulf %48, %50 : vector<8x32xf32>
      %c0_26 = arith.constant 0 : index
      %c0_27 = arith.constant 0 : index
      %52 = vector.load %arg4[%c0_26, %c0_27] : memref<32x32xf32, #tpu.memory_space<vmem>>, vector<32x32xf32>
      %cst_28 = arith.constant dense<0.000000e+00> : vector<8x32xf32>
      %53 = tpu.matmul %51, %52, %cst_28 {dimension_numbers = #tpu.dot_dimension_numbers<[1], [0], [0], [1], [0, 0, 1, 1], [], []>} : vector<8x32xf32>, vector<32x32xf32>, vector<8x32xf32> -> vector<8x32xf32>
      %c0_29 = arith.constant 0 : index
      %c0_30 = arith.constant 0 : index
      %54 = vector.load %arg5[%c0_29, %c0_30] : memref<1x32xf32, #tpu.memory_space<vmem>>, vector<1x32xf32>
      %55 = vector.broadcast %54 : vector<1x32xf32> to vector<8x32xf32>
      %56 = arith.addf %53, %55 : vector<8x32xf32>
      %cst_31 = arith.constant 0.000000e+00 : f32
      %57 = vector.broadcast %cst_31 : f32 to vector<8x32xf32>
      %58 = arith.cmpf ogt, %56, %57 : vector<8x32xf32>
      %cst_32 = arith.constant 0.00999999977 : f32
      %59 = vector.broadcast %cst_32 : f32 to vector<8x32xf32>
      %60 = arith.mulf %59, %56 : vector<8x32xf32>
      %61 = arith.select %58, %56, %60 : vector<8x32xi1>, vector<8x32xf32>
      %c0_33 = arith.constant 0 : index
      %c0_34 = arith.constant 0 : index
      %62 = vector.load %arg6[%c0_33, %c0_34] : memref<32x16xf32, #tpu.memory_space<vmem>>, vector<32x16xf32>
      %cst_35 = arith.constant dense<0.000000e+00> : vector<8x16xf32>
      %63 = tpu.matmul %61, %62, %cst_35 {dimension_numbers = #tpu.dot_dimension_numbers<[1], [0], [0], [1], [0, 0, 1, 1], [], []>} : vector<8x32xf32>, vector<32x16xf32>, vector<8x16xf32> -> vector<8x16xf32>
      %c0_36 = arith.constant 0 : index
      %c0_37 = arith.constant 0 : index
      %64 = vector.load %arg7[%c0_36, %c0_37] : memref<1x16xf32, #tpu.memory_space<vmem>>, vector<1x16xf32>
      %65 = vector.broadcast %64 : vector<1x16xf32> to vector<8x16xf32>
      %66 = arith.addf %63, %65 : vector<8x16xf32>
      %cst_38 = arith.constant 0.000000e+00 : f32
      %67 = vector.broadcast %cst_38 : f32 to vector<8x16xf32>
      %68 = arith.cmpf ogt, %66, %67 : vector<8x16xf32>
      %cst_39 = arith.constant 0.00999999977 : f32
      %69 = vector.broadcast %cst_39 : f32 to vector<8x16xf32>
      %70 = arith.mulf %69, %66 : vector<8x16xf32>
      %71 = arith.select %68, %66, %70 : vector<8x16xi1>, vector<8x16xf32>
      %c0_40 = arith.constant 0 : index
      %c0_41 = arith.constant 0 : index
      %72 = vector.load %arg8[%c0_40, %c0_41] : memref<1x16xf32, #tpu.memory_space<vmem>>, vector<1x16xf32>
      %73 = vector.broadcast %72 : vector<1x16xf32> to vector<8x16xf32>
      %74 = arith.mulf %71, %73 : vector<8x16xf32>
      %cst_42 = arith.constant dense<0.000000e+00> : vector<8xf32>
      %75 = vector.multi_reduction <add>, %74, %cst_42 [1] : vector<8x16xf32> to vector<8xf32>
      %c0_43 = arith.constant 0 : index
      %76 = memref.load %arg9[%c0_43] : memref<1xf32, #tpu.memory_space<smem>>
      %77 = vector.broadcast %76 : f32 to vector<8xf32>
      %78 = arith.addf %75, %77 : vector<8xf32>
      %79 = vector.shape_cast %78 : vector<8xf32> to vector<1x1x8xf32>
      %c0_44 = arith.constant 0 : index
      %c0_45 = arith.constant 0 : index
      %c0_46 = arith.constant 0 : index
      %80 = vector.load %arg10[%c0_44, %c0_45, %c0_46] : memref<1x1x8xf32, #tpu.memory_space<vmem>>, vector<1x1x8xf32>
      tpu.vector_store %arg10[%c0_44, %c0_45, %c0_46], %79 {strides = array<i32>} : memref<1x1x8xf32, #tpu.memory_space<vmem>>, vector<1x1x8xf32>,
    } else {
    }
    return
  }
  func.func @transform_0(%arg0: i32, %arg1: i32) -> (i32, i32, i32) {
    %c0_i32 = arith.constant 0 : i32
    %c0_i32_0 = arith.constant 0 : i32
    return %arg1, %arg0, %c0_i32 : i32, i32, i32
  }
  func.func @transform_1(%arg0: i32, %arg1: i32) -> (i32, i32) {
    %c0_i32 = arith.constant 0 : i32
    %c0_i32_0 = arith.constant 0 : i32
    %c0_i32_1 = arith.constant 0 : i32
    return %c0_i32, %c0_i32_0 : i32, i32
  }
  func.func @transform_2(%arg0: i32, %arg1: i32) -> (i32, i32) {
    %c0_i32 = arith.constant 0 : i32
    %c0_i32_0 = arith.constant 0 : i32
    %c0_i32_1 = arith.constant 0 : i32
    return %c0_i32, %c0_i32_0 : i32, i32
  }
  func.func @transform_3(%arg0: i32, %arg1: i32) -> (i32, i32) {
    %c0_i32 = arith.constant 0 : i32
    %c0_i32_0 = arith.constant 0 : i32
    %c0_i32_1 = arith.constant 0 : i32
    return %c0_i32, %c0_i32_0 : i32, i32
  }
  func.func @transform_4(%arg0: i32, %arg1: i32) -> (i32, i32) {
    %c0_i32 = arith.constant 0 : i32
    %c0_i32_0 = arith.constant 0 : i32
    %c0_i32_1 = arith.constant 0 : i32
    return %c0_i32, %c0_i32_0 : i32, i32
  }
  func.func @transform_5(%arg0: i32, %arg1: i32) -> (i32, i32) {
    %c0_i32 = arith.constant 0 : i32
    %c0_i32_0 = arith.constant 0 : i32
    %c0_i32_1 = arith.constant 0 : i32
    return %c0_i32, %c0_i32_0 : i32, i32
  }
  func.func @transform_6(%arg0: i32, %arg1: i32) -> (i32, i32) {
    %c0_i32 = arith.constant 0 : i32
    %c0_i32_0 = arith.constant 0 : i32
    %c0_i32_1 = arith.constant 0 : i32
    return %c0_i32, %c0_i32_0 : i32, i32
  }
  func.func @transform_7(%arg0: i32, %arg1: i32) -> i32 {
    %c0_i32 = arith.constant 0 : i32
    %c0_i32_0 = arith.constant 0 : i32
    return %c0_i32 : i32
  }
  func.func @transform_8(%arg0: i32, %arg1: i32) -> (i32, i32, i32) {
    %c0_i32 = arith.constant 0 : i32
    %c0_i32_0 = arith.constant 0 : i32
    %c0_i32_1 = arith.constant 0 : i32
    return %arg0, %c0_i32, %c0_i32_0 : i32, i32, i32
  }
}

</mosaic_0001>

<llo_original>
// kernel: tpu_custom_call.1
$region0: #{tpu_custom_call.1}
  #allocation0 [shape = 'u32[]', space=smem, size = 0x4, offset = 0x4, fixed_abs, tag = 'smem constant byte address 0x4 - core index']
  #allocation1 [shape = 'u32[144,128]{1,0:T(1,128)}', space=vmem, size = 0x12000, scoped, tag = 'internal scratch']
  #allocation2 [shape = 'f32[1,8]{1,0:T(1,128)}', space=vmem, size = 0x200, scoped, tag = 'scratch operand']
  #allocation3 [shape = 'f32[1,8]{1,0:T(1,128)}', space=vmem, size = 0x200, scoped, tag = 'scratch operand']
  #allocation4 [shape = 'f32[8,32]{1,0:T(8,128)}', space=vmem, size = 0x1000, scoped, tag = 'scratch operand']
  #allocation5 [shape = 'f32[1]{0:T(128)S(6)}', space=smem, size = 0x200, scoped, tag = 'scoped memory for tpu_custom_call.1']
  %s0 = inlined_call_operand.hbm [shape: f32[24,16,32], index: 0, kind: input, shape index: {}]
  %s1 = inlined_call_operand.vmem [shape: f32[1,32], index: 1, kind: input, shape index: {}]
  %s2 = inlined_call_operand.vmem [shape: f32[32,32], index: 2, kind: input, shape index: {}]
  %s3 = inlined_call_operand.vmem [shape: f32[1,32], index: 3, kind: input, shape index: {}]
  %s4 = inlined_call_operand.vmem [shape: f32[32,16], index: 4, kind: input, shape index: {}]
  %s5 = inlined_call_operand.vmem [shape: f32[1,16], index: 5, kind: input, shape index: {}]
  %s6 = inlined_call_operand.vmem [shape: f32[1,16], index: 6, kind: input, shape index: {}]
  %s7 = inlined_call_operand.<no memory space> [shape: f32[1], index: 7, kind: input, shape index: {}]
  %s8 = inlined_call_operand.hbm [shape: f32[2,1,8], index: 8, kind: output, shape index: {}]
  %s9 = sld [smem:[#allocation0]]
  $region77: #{tpu_custom_call.1} parent=0
    _
  %s11 = ssub.s32 1, %s9
  %s12 = scalar_select 0, %s11, %s9
  %13 = sst [smem:[#allocation5]] %s7
  $region1: #{tpu_custom_call.1} parent=0
    #allocation6 [shape = 'u8[65536]{0}', space=vmem, size = 0x10000, scoped, tag = 'input window, operand 0']
    #allocation7 [shape = 's32[2]{0}', space=sflag, size = 0x8, scoped, tag = 'scoped memory for tpu_custom_call.1']
    #allocation8 [shape = 's32[2]{0}', space=sflag, size = 0x8, scoped, tag = 'scoped memory for tpu_custom_call.1']
    #allocation9 [shape = 'u8[1024]{0}', space=vmem, size = 0x400, scoped, tag = 'output window, operand 0']
    %14 = vsyncpa [#allocation7], 0
    %s15 = scalar_lea.sflag [#allocation7], 1
    %16 = vsyncpa %s15, 0
    %17 = vsyncpa [#allocation8], 0
    %s18 = scalar_lea.sflag [#allocation8], 1
    %19 = vsyncpa %s18, 0
    loop: start=0, step=1, limit=8
    $region2: #{tpu_custom_call.1} parent=1 // loop_pre_header
      _
    $region3: #{tpu_custom_call.1} parent=1 // loop_header
      %s21 = sphi 0, %s25
      %p22 = scmp.ge.s32.totalorder %s21, 8
      %s28 = sphi 0, %s40
      %s29 = sphi 0, %s36
      %s30 = sphi 0, %s28
      %s31 = sphi 0, %s29
      %s32 = sphi 0, %s30
      %s33 = sphi 0, %s31
      %s45 = sphi 0, %s47
      %s48 = sphi 0, %s45
      %s49 = sphi 0, %s48
      %s65 = sphi 0, %s49
      %s69 = sphi 0, %s69
      %s71 = sphi 0, %s69
      %s72 = sphi 0, %s71
      %s86 = sphi 0, %s72
      %s90 = sphi 0, %s90
      %s92 = sphi 0, %s90
      %s93 = sphi 0, %s92
      %s107 = sphi 0, %s93
      %s111 = sphi 0, %s111
      %s113 = sphi 0, %s111
      %s114 = sphi 0, %s113
      %s128 = sphi 0, %s114
      %s132 = sphi 0, %s132
      %s134 = sphi 0, %s132
      %s135 = sphi 0, %s134
      %s149 = sphi 0, %s135
      %s153 = sphi 0, %s153
      %s155 = sphi 0, %s153
      %s156 = sphi 0, %s155
      %s170 = sphi 0, %s156
      %s174 = sphi 0, %s174
      %s176 = sphi 0, %s174
      %s177 = sphi 0, %s176
      %s191 = sphi 0, %s177
      %s195 = sphi 0, %s195
      %s197 = sphi 0, %s195
      %s198 = sphi 0, %s197
      %s212 = sphi 0, %s198
      %s218 = sphi 0, %s220
      %s221 = sphi 0, %s218
      %s222 = sphi 0, %s221
      %s238 = sphi 0, %s222
    $region4: #{tpu_custom_call.1} parent=1 // loop_header_branch
      %24 = sbr.rel (%p22) target = $region8
    $region5: #{tpu_custom_call.1} parent=1 // loop_body
      %s26 = ssub.s32 %s21, 1
      %s27 = ssub.s32 %s21, 2
      %s34 = sadd.s32 1, %s29
      %p35 = scmp.ge.s32.totalorder %s34, 3
      %s36 = scalar_select %p35, 0, %s34
      %s37 = sadd.s32 1, %s28
      %s38 = scalar_select %p35, %s37, %s28
      %p39 = scmp.ge.s32.totalorder %s38, 2
      %s40 = scalar_select %p39, 0, %s38
      %s41 = ssub.s32 %s29, %s36
      %s42 = ssub.s32 %s28, %s40
      %s43 = sor.u32 %s41, %s42
      %p44 = scmp.eq.s32.totalorder %s43, 0
      %s46 = sadd.s32 %s45, 1
      %s47 = scalar_select %p44, %s45, %s46
      %p50 = pneg %p44
      %p51 = scmp.eq.s32.totalorder %s21, 5
      %p52 = por %p50, %p51
      %p53 = scmp.ne.s32.totalorder %s45, %s48
      %p54 = scmp.eq.s32.totalorder %s21, 0
      %p55 = por %p53, %p54
      %p56 = scmp.ne.s32.totalorder %s45, %s48
      %p57 = scmp.eq.s32.totalorder %s26, 5
      %p58 = por %p56, %p57
      %p59 = scmp.ne.s32.totalorder %s48, %s49
      %p60 = scmp.eq.s32.totalorder %s26, 0
      %p61 = por %p59, %p60
      %p62 = scmp.ne.s32.totalorder %s48, %s49
      %p63 = scmp.eq.s32.totalorder %s27, 5
      %p64 = por %p62, %p63
      %p66 = scmp.ne.s32.totalorder %s49, %s65
      %p67 = scmp.eq.s32.totalorder %s27, 0
      %p68 = por %p66, %p67
      %s70 = sadd.s32 %s69, 1
      %p73 = scmp.eq.s32.totalorder %s21, 5
      %p74 = scmp.ne.s32.totalorder %s69, %s71
      %p75 = scmp.eq.s32.totalorder %s21, 0
      %p76 = por %p74, %p75
      %p77 = scmp.ne.s32.totalorder %s69, %s71
      %p78 = scmp.eq.s32.totalorder %s26, 5
      %p79 = por %p77, %p78
      %p80 = scmp.ne.s32.totalorder %s71, %s72
      %p81 = scmp.eq.s32.totalorder %s26, 0
      %p82 = por %p80, %p81
      %p83 = scmp.ne.s32.totalorder %s71, %s72
      %p84 = scmp.eq.s32.totalorder %s27, 5
      %p85 = por %p83, %p84
      %p87 = scmp.ne.s32.totalorder %s72, %s86
      %p88 = scmp.eq.s32.totalorder %s27, 0
      %p89 = por %p87, %p88
      %s91 = sadd.s32 %s90, 1
      %p94 = scmp.eq.s32.totalorder %s21, 5
      %p95 = scmp.ne.s32.totalorder %s90, %s92
      %p96 = scmp.eq.s32.totalorder %s21, 0
      %p97 = por %p95, %p96
      %p98 = scmp.ne.s32.totalorder %s90, %s92
      %p99 = scmp.eq.s32.totalorder %s26, 5
      %p100 = por %p98, %p99
      %p101 = scmp.ne.s32.totalorder %s92, %s93
      %p102 = scmp.eq.s32.totalorder %s26, 0
      %p103 = por %p101, %p102
      %p104 = scmp.ne.s32.totalorder %s92, %s93
      %p105 = scmp.eq.s32.totalorder %s27, 5
      %p106 = por %p104, %p105
      %p108 = scmp.ne.s32.totalorder %s93, %s107
      %p109 = scmp.eq.s32.totalorder %s27, 0
      %p110 = por %p108, %p109
      %s112 = sadd.s32 %s111, 1
      %p115 = scmp.eq.s32.totalorder %s21, 5
      %p116 = scmp.ne.s32.totalorder %s111, %s113
      %p117 = scmp.eq.s32.totalorder %s21, 0
      %p118 = por %p116, %p117
      %p119 = scmp.ne.s32.totalorder %s111, %s113
      %p120 = scmp.eq.s32.totalorder %s26, 5
      %p121 = por %p119, %p120
      %p122 = scmp.ne.s32.totalorder %s113, %s114
      %p123 = scmp.eq.s32.totalorder %s26, 0
      %p124 = por %p122, %p123
      %p125 = scmp.ne.s32.totalorder %s113, %s114
      %p126 = scmp.eq.s32.totalorder %s27, 5
      %p127 = por %p125, %p126
      %p129 = scmp.ne.s32.totalorder %s114, %s128
      %p130 = scmp.eq.s32.totalorder %s27, 0
      %p131 = por %p129, %p130
      %s133 = sadd.s32 %s132, 1
      %p136 = scmp.eq.s32.totalorder %s21, 5
      %p137 = scmp.ne.s32.totalorder %s132, %s134
      %p138 = scmp.eq.s32.totalorder %s21, 0
      %p139 = por %p137, %p138
      %p140 = scmp.ne.s32.totalorder %s132, %s134
      %p141 = scmp.eq.s32.totalorder %s26, 5
      %p142 = por %p140, %p141
      %p143 = scmp.ne.s32.totalorder %s134, %s135
      %p144 = scmp.eq.s32.totalorder %s26, 0
      %p145 = por %p143, %p144
      %p146 = scmp.ne.s32.totalorder %s134, %s135
      %p147 = scmp.eq.s32.totalorder %s27, 5
      %p148 = por %p146, %p147
      %p150 = scmp.ne.s32.totalorder %s135, %s149
      %p151 = scmp.eq.s32.totalorder %s27, 0
      %p152 = por %p150, %p151
      %s154 = sadd.s32 %s153, 1
      %p157 = scmp.eq.s32.totalorder %s21, 5
      %p158 = scmp.ne.s32.totalorder %s153, %s155
      %p159 = scmp.eq.s32.totalorder %s21, 0
      %p160 = por %p158, %p159
      %p161 = scmp.ne.s32.totalorder %s153, %s155
      %p162 = scmp.eq.s32.totalorder %s26, 5
      %p163 = por %p161, %p162
      %p164 = scmp.ne.s32.totalorder %s155, %s156
      %p165 = scmp.eq.s32.totalorder %s26, 0
      %p166 = por %p164, %p165
      %p167 = scmp.ne.s32.totalorder %s155, %s156
      %p168 = scmp.eq.s32.totalorder %s27, 5
      %p169 = por %p167, %p168
      %p171 = scmp.ne.s32.totalorder %s156, %s170
      %p172 = scmp.eq.s32.totalorder %s27, 0
      %p173 = por %p171, %p172
      %s175 = sadd.s32 %s174, 1
      %p178 = scmp.eq.s32.totalorder %s21, 5
      %p179 = scmp.ne.s32.totalorder %s174, %s176
      %p180 = scmp.eq.s32.totalorder %s21, 0
      %p181 = por %p179, %p180
      %p182 = scmp.ne.s32.totalorder %s174, %s176
      %p183 = scmp.eq.s32.totalorder %s26, 5
      %p184 = por %p182, %p183
      %p185 = scmp.ne.s32.totalorder %s176, %s177
      %p186 = scmp.eq.s32.totalorder %s26, 0
      %p187 = por %p185, %p186
      %p188 = scmp.ne.s32.totalorder %s176, %s177
      %p189 = scmp.eq.s32.totalorder %s27, 5
      %p190 = por %p188, %p189
      %p192 = scmp.ne.s32.totalorder %s177, %s191
      %p193 = scmp.eq.s32.totalorder %s27, 0
      %p194 = por %p192, %p193
      %s196 = sadd.s32 %s195, 1
      %p199 = scmp.eq.s32.totalorder %s21, 5
      %p200 = scmp.ne.s32.totalorder %s195, %s197
      %p201 = scmp.eq.s32.totalorder %s21, 0
      %p202 = por %p200, %p201
      %p203 = scmp.ne.s32.totalorder %s195, %s197
      %p204 = scmp.eq.s32.totalorder %s26, 5
      %p205 = por %p203, %p204
      %p206 = scmp.ne.s32.totalorder %s197, %s198
      %p207 = scmp.eq.s32.totalorder %s26, 0
      %p208 = por %p206, %p207
      %p209 = scmp.ne.s32.totalorder %s197, %s198
      %p210 = scmp.eq.s32.totalorder %s27, 5
      %p211 = por %p209, %p210
      %p213 = scmp.ne.s32.totalorder %s198, %s212
      %p214 = scmp.eq.s32.totalorder %s27, 0
      %p215 = por %p213, %p214
      %s216 = ssub.s32 %s28, %s40
      %p217 = scmp.eq.s32.totalorder %s216, 0
      %s219 = sadd.s32 %s218, 1
      %s220 = scalar_select %p217, %s218, %s219
      %p223 = pneg %p217
      %p224 = scmp.eq.s32.totalorder %s21, 5
      %p225 = por %p223, %p224
      %p226 = scmp.ne.s32.totalorder %s218, %s221
      %p227 = scmp.eq.s32.totalorder %s21, 0
      %p228 = por %p226, %p227
      %p229 = scmp.ne.s32.totalorder %s218, %s221
      %p230 = scmp.eq.s32.totalorder %s26, 5
      %p231 = por %p229, %p230
      %p232 = scmp.ne.s32.totalorder %s221, %s222
      %p233 = scmp.eq.s32.totalorder %s26, 0
      %p234 = por %p232, %p233
      %p235 = scmp.ne.s32.totalorder %s221, %s222
      %p236 = scmp.eq.s32.totalorder %s27, 5
      %p237 = por %p235, %p236
      %p239 = scmp.ne.s32.totalorder %s222, %s238
      %p240 = scmp.eq.s32.totalorder %s27, 0
      %p241 = por %p239, %p240
      %p242 = scmp.le.s32.totalorder 1, %s21
      %p243 = scmp.lt.s32.totalorder %s21, 7
      %p244 = pnand %p242, %p243
      %p245 = pneg %p244
      // Predicated region
      $region9: #{tpu_custom_call.1} parent=5 // pred_check
        _
      $region10: #{tpu_custom_call.1} parent=5 // pred_check_branch
        %247 = sbr.rel (%p244) target = $region12
      $region11: #{tpu_custom_call.1} parent=5 // pred_region
        %s248 = ssub.s32 %s21, 1
        // Predicated region
        $region13: #{tpu_custom_call.1} parent=11 // pred_check
          %p249 = pneg %p82
        $region14: #{tpu_custom_call.1} parent=11 // pred_check_branch
          %251 = sbr.rel (%p249) target = $region16
        $region15: #{tpu_custom_call.1} parent=11 // pred_region
          _
        $region16: #{tpu_custom_call.1} parent=11 // pred_fallthru
          _
        // Predicated region
        $region17: #{tpu_custom_call.1} parent=11 // pred_check
          %p252 = pneg %p103
        $region18: #{tpu_custom_call.1} parent=11 // pred_check_branch
          %254 = sbr.rel (%p252) target = $region20
        $region19: #{tpu_custom_call.1} parent=11 // pred_region
          _
        $region20: #{tpu_custom_call.1} parent=11 // pred_fallthru
          _
        // Predicated region
        $region21: #{tpu_custom_call.1} parent=11 // pred_check
          %p255 = pneg %p124
        $region22: #{tpu_custom_call.1} parent=11 // pred_check_branch
          %257 = sbr.rel (%p255) target = $region24
        $region23: #{tpu_custom_call.1} parent=11 // pred_region
          _
        $region24: #{tpu_custom_call.1} parent=11 // pred_fallthru
          _
        // Predicated region
        $region25: #{tpu_custom_call.1} parent=11 // pred_check
          %p258 = pneg %p145
        $region26: #{tpu_custom_call.1} parent=11 // pred_check_branch
          %260 = sbr.rel (%p258) target = $region28
        $region27: #{tpu_custom_call.1} parent=11 // pred_region
          _
        $region28: #{tpu_custom_call.1} parent=11 // pred_fallthru
          _
        // Predicated region
        $region29: #{tpu_custom_call.1} parent=11 // pred_check
          %p261 = pneg %p166
        $region30: #{tpu_custom_call.1} parent=11 // pred_check_branch
          %263 = sbr.rel (%p261) target = $region32
        $region31: #{tpu_custom_call.1} parent=11 // pred_region
          _
        $region32: #{tpu_custom_call.1} parent=11 // pred_fallthru
          _
        // Predicated region
        $region33: #{tpu_custom_call.1} parent=11 // pred_check
          %p264 = pneg %p187
        $region34: #{tpu_custom_call.1} parent=11 // pred_check_branch
          %266 = sbr.rel (%p264) target = $region36
        $region35: #{tpu_custom_call.1} parent=11 // pred_region
          _
        $region36: #{tpu_custom_call.1} parent=11 // pred_fallthru
          _
        // Predicated region
        $region37: #{tpu_custom_call.1} parent=11 // pred_check
          %p267 = pneg %p208
        $region38: #{tpu_custom_call.1} parent=11 // pred_check_branch
          %269 = sbr.rel (%p267) target = $region40
        $region39: #{tpu_custom_call.1} parent=11 // pred_region
          _
        $region40: #{tpu_custom_call.1} parent=11 // pred_fallthru
          _
      $region12: #{tpu_custom_call.1} parent=5 // pred_fallthru
        _
      %p270 = scmp.lt.s32.totalorder %s21, 6
      // Predicated region
      $region41: #{tpu_custom_call.1} parent=5 // pred_check
        %p271 = pneg %p270
      $region42: #{tpu_custom_call.1} parent=5 // pred_check_branch
        %273 = sbr.rel (%p271) target = $region44
      $region43: #{tpu_custom_call.1} parent=5 // pred_region
        // Predicated region
        $region45: #{tpu_custom_call.1} parent=43 // pred_check
          %p274 = pneg %p55
        $region46: #{tpu_custom_call.1} parent=43 // pred_check_branch
          %276 = sbr.rel (%p274) target = $region48
        $region47: #{tpu_custom_call.1} parent=43 // pred_region
          %s277 = sand.u32 %s45, 1
          %s278 = scalar_lea.sflag [#allocation7], %s277
          %s279 = sand.u32 %s45, 1
          %s280 = smul.addr %s279, 64
          %s281 = scalar_lea.vmem [#allocation6], %s280
          %s282 = smul.u32 8, %s29
          %s284 = ssub.s32 1024, 1024
          %285 = vsyncadd %s278, %s284
          %s286 = smul.addr %s282, 2
          %s287 = sadd.s32 %s28, %s286
          %s288 = smul.addr %s287, 128
          %s289 = scalar_lea.hbm %s0, %s288
          %s290 = sshll.u32 %s281, 4
          %s291 = int_to_ptr.vmem [resolvable:$true] %s290
          %296 = dma.hbm_to_vmem [thread:$0]  %s289, 1024, %s291, %s278, 256, 128, 8
        $region48: #{tpu_custom_call.1} parent=43 // pred_fallthru
          _
      $region44: #{tpu_custom_call.1} parent=5 // pred_fallthru
        _
      %p297 = scmp.le.s32.totalorder 1, %s21
      %p298 = scmp.lt.s32.totalorder %s21, 7
      %p299 = pnand %p297, %p298
      %p300 = pneg %p299
      // Predicated region
      $region49: #{tpu_custom_call.1} parent=5 // pred_check
        _
      $region50: #{tpu_custom_call.1} parent=5 // pred_check_branch
        %302 = sbr.rel (%p299) target = $region52
      $region51: #{tpu_custom_call.1} parent=5 // pred_region
        %s303 = ssub.s32 %s21, 1
        %s304 = sand.u32 %s48, 1
        %s305 = scalar_lea.sflag [#allocation7], %s304
        %s306 = sand.u32 %s48, 1
        %s307 = smul.addr %s306, 64
        %s308 = scalar_lea.vmem [#allocation6], %s307
        // Predicated region
        $region53: #{tpu_custom_call.1} parent=51 // pred_check
          %p309 = pneg %p61
        $region54: #{tpu_custom_call.1} parent=51 // pred_check_branch
          %311 = sbr.rel (%p309) target = $region56
        $region55: #{tpu_custom_call.1} parent=51 // pred_region
          %312 = dma.done %s305, 1024
        $region56: #{tpu_custom_call.1} parent=51 // pred_fallthru
          _
        %s313 = sand.u32 %s48, 1
        %s314 = scalar_lea.sflag [#allocation7], %s313
        %s315 = sand.u32 %s48, 1
        %s316 = smul.addr %s315, 64
        %s317 = scalar_lea.vmem [#allocation6], %s316
        %p318 = pneg %p61
        %p319 = pneg %p58
        %p320 = pneg %p82
        %p321 = pneg %p79
        %p322 = pneg %p103
        %p323 = pneg %p100
        %p324 = pneg %p124
        %p325 = pneg %p121
        %p326 = pneg %p145
        %p327 = pneg %p142
        %p328 = pneg %p166
        %p329 = pneg %p163
        %p330 = pneg %p187
        %p331 = pneg %p184
        %p332 = pneg %p208
        %p333 = pneg %p205
        %p334 = pneg %p234
        %p335 = pneg %p231
        %s336 = sand.u32 %s221, 1
        %s337 = scalar_lea.sflag [#allocation8], %s336
        %s338 = sand.u32 %s221, 1
        %s339 = scalar_lea.vmem [#allocation9], %s338
        %s340 = smul.u32 8, %s31
        %p341 = scmp.eq.s32.totalorder %s31, 0
        // Predicated region
        $region57: #{tpu_custom_call.1} parent=51 // pred_check
          %p342 = pneg %p341
        $region58: #{tpu_custom_call.1} parent=51 // pred_check_branch
          %344 = sbr.rel (%p342) target = $region60
        $region59: #{tpu_custom_call.1} parent=51 // pred_region
          %vm345 = vcmask 57344
          %346 = vst.msk [vmem:[#allocation2] sm:$0x1] %vm345, -inf
          %347 = vst.msk [vmem:[#allocation3] sm:$0x1] %vm345, 0.0
          %vm348 = vcmask 261120
          %349 = vst.msk [vmem:[#allocation4] sm:$0xff] %vm348, 0.0
        $region60: #{tpu_custom_call.1} parent=51 // pred_fallthru
          _
        %v350 = vld [vmem:[%s308] sm:$0xff]
        %v351 = vld [vmem:[%s308 + $0x8] sm:$0xff]
        %v352 = vld [vmem:[%s308 + $0x10] sm:$0xff]
        %v353 = vld [vmem:[%s308 + $0x18] sm:$0xff]
        %v354 = vld [vmem:[%s308 + $0x20] sm:$0xff]
        %v355 = vld [vmem:[%s308 + $0x28] sm:$0xff]
        %v356 = vld [vmem:[%s308 + $0x30] sm:$0xff]
        %v357 = vld [vmem:[%s308 + $0x38] sm:$0xff]
        %v358 = vld [vmem:[%s1] sm:$0x1]
        %v360 = vlaneseq
        %v361 = vshrl.u32 %v360, 7
        %v362 = vsub.s32 0, %v361
        %v363 = vrot.slane %v358, %v362
        %v365 = vmul.f32 %v350, %v363
        %v366 = vmul.f32 %v351, %v363
        %v367 = vmul.f32 %v352, %v363
        %v368 = vmul.f32 %v353, %v363
        %v369 = vmul.f32 %v354, %v363
        %v370 = vmul.f32 %v355, %v363
        %v371 = vmul.f32 %v356, %v363
        %v372 = vmul.f32 %v357, %v363
        %vm373 = vcmask 261120
        %v374 = vsel %vm373, %v365, 0.0
        %375 = vadd.xlane.f32.xlu0 %v374
        %v376 = vpop.xlane.xlu0 %375
        %v377 = vsel %vm373, %v366, 0.0
        %378 = vadd.xlane.f32.xlu0 %v377
        %v379 = vpop.xlane.xlu0 %378
        %v380 = vsel %vm373, %v367, 0.0
        %381 = vadd.xlane.f32.xlu0 %v380
        %v382 = vpop.xlane.xlu0 %381
        %v383 = vsel %vm373, %v368, 0.0
        %384 = vadd.xlane.f32.xlu0 %v383
        %v385 = vpop.xlane.xlu0 %384
        %v386 = vsel %vm373, %v369, 0.0
        %387 = vadd.xlane.f32.xlu0 %v386
        %v388 = vpop.xlane.xlu0 %387
        %v389 = vsel %vm373, %v370, 0.0
        %390 = vadd.xlane.f32.xlu0 %v389
        %v391 = vpop.xlane.xlu0 %390
        %v392 = vsel %vm373, %v371, 0.0
        %393 = vadd.xlane.f32.xlu0 %v392
        %v394 = vpop.xlane.xlu0 %393
        %v395 = vsel %vm373, %v372, 0.0
        %396 = vadd.xlane.f32.xlu0 %v395
        %v397 = vpop.xlane.xlu0 %396
        %s398 = smul.u32 %s31, 8
        %v399 = vlaneseq
        %v400 = vshrl.u32 %v399, 7
        %v401 = vstv %s398
        %v402 = vadd.s32 %v401, %v400
        %vm403 = vcmp.lt.s32.totalorder %v402, 20
        %v412 = vlaneseq
        %v413 = vand.u32 %v412, 127
        %v414 = vlaneseq
        %v415 = vshrl.u32 %v414, 7
        %v416 = vsub.s32 %v413, %v415
        %v417 = vrot.slane %v376, %v416
        %v418 = vlaneseq
        %v419 = vshrl.u32 %v418, 7
        %v420 = vsub.s32 %v413, %v419
        %v421 = vrot.slane %v379, %v420
        %v422 = vlaneseq
        %v423 = vshrl.u32 %v422, 7
        %v424 = vsub.s32 %v413, %v423
        %v425 = vrot.slane %v382, %v424
        %v426 = vlaneseq
        %v427 = vshrl.u32 %v426, 7
        %v428 = vsub.s32 %v413, %v427
        %v429 = vrot.slane %v385, %v428
        %v430 = vlaneseq
        %v431 = vshrl.u32 %v430, 7
        %v432 = vsub.s32 %v413, %v431
        %v433 = vrot.slane %v388, %v432
        %v434 = vlaneseq
        %v435 = vshrl.u32 %v434, 7
        %v436 = vsub.s32 %v413, %v435
        %v437 = vrot.slane %v391, %v436
        %v438 = vlaneseq
        %v439 = vshrl.u32 %v438, 7
        %v440 = vsub.s32 %v413, %v439
        %v441 = vrot.slane %v394, %v440
        %v442 = vlaneseq
        %v443 = vshrl.u32 %v442, 7
        %v444 = vsub.s32 %v413, %v443
        %v445 = vrot.slane %v397, %v444
        %vm446 = vcmask 1041409
        %v447 = vsel %vm446, %v421, %v417
        %vm448 = vcmask 1042434
        %v449 = vsel %vm448, %v425, %v447
        %vm450 = vcmask 1043459
        %v451 = vsel %vm450, %v429, %v449
        %vm452 = vcmask 1044484
        %v453 = vsel %vm452, %v433, %v451
        %vm454 = vcmask 1045509
        %v455 = vsel %vm454, %v437, %v453
        %vm456 = vcmask 1046534
        %v457 = vsel %vm456, %v441, %v455
        %vm458 = vcmask 1047559
        %v459 = vsel %vm458, %v445, %v457
        %v461 = vsel %vm403, %v459, -inf
        %v462 = vld [vmem:[#allocation2] sm:$0x1]
        %vm463 = vcmask 64512
        %v464 = vsel %vm463, %v461, -inf
        %v465 = vrot.slane %v464, 4
        %v466 = vmax.f32 %v464, %v465
        %v467 = vrot.slane %v466, 2
        %v468 = vmax.f32 %v466, %v467
        %v469 = vrot.slane %v468, 1
        %v470 = vmax.f32 %v468, %v469
        %v471 = vmax.f32 %v462, %v470
        %v472 = vsub.f32 %v462, %v471
        %v473 = vmul.f32 %v472, 1.442695
        %v474 = vpow.pop %v473
        %v476 = vlaneseq
        %v477 = vshrl.u32 %v476, 7
        %v478 = vsub.s32 0, %v477
        %v479 = vrot.slane %v471, %v478
        %v481 = vsub.f32 %v461, %v479
        %v482 = vmul.f32 %v481, 1.442695
        %v483 = vpow.pop %v482
        %v484 = vld [vmem:[#allocation3] sm:$0x1]
        %v485 = vmul.f32 %v474, %v484
        %v486 = vsel %vm463, %v483, 0.0
        %v487 = vrot.slane %v486, 4
        %v488 = vadd.f32 %v486, %v487
        %v489 = vrot.slane %v488, 2
        %v490 = vadd.f32 %v488, %v489
        %v491 = vrot.slane %v490, 1
        %v492 = vadd.f32 %v490, %v491
        %v493 = vadd.f32 %v485, %v492
        %vm494 = vcmask 57344
        %495 = vst.msk [vmem:[#allocation3] sm:$0x1] %vm494, %v493
        %v496 = vlaneseq
        %v497 = vshrl.u32 %v496, 7
        %v498 = vsub.s32 0, %v497
        %v499 = vrot.slane %v474, %v498
        %501 = vbcast.lane.b32.xlu0 %v499, 256
        %v502 = vpop.permute.xlu0 %501
        %v503 = vld [vmem:[#allocation4] sm:$0xff]
        %v504 = vmul.f32 %v502, %v503
        %v505 = vlaneseq
        %v506 = vshrl.u32 %v505, 7
        %v507 = vsub.s32 0, %v506
        %v508 = vrot.slane %v483, %v507
        %510 = vbcast.lane.b32.xlu0 %v508, 256
        %v511 = vpop.permute.xlu0 %510
        %v512 = vlaneseq
        %v513 = vshrl.u32 %v512, 7
        %v514 = vsub.s32 1, %v513
        %v515 = vrot.slane %v483, %v514
        %517 = vbcast.lane.b32.xlu0 %v515, 256
        %v518 = vpop.permute.xlu0 %517
        %v519 = vlaneseq
        %v520 = vshrl.u32 %v519, 7
        %v521 = vsub.s32 2, %v520
        %v522 = vrot.slane %v483, %v521
        %524 = vbcast.lane.b32.xlu0 %v522, 256
        %v525 = vpop.permute.xlu0 %524
        %v526 = vlaneseq
        %v527 = vshrl.u32 %v526, 7
        %v528 = vsub.s32 3, %v527
        %v529 = vrot.slane %v483, %v528
        %531 = vbcast.lane.b32.xlu0 %v529, 256
        %v532 = vpop.permute.xlu0 %531
        %v533 = vlaneseq
        %v534 = vshrl.u32 %v533, 7
        %v535 = vsub.s32 4, %v534
        %v536 = vrot.slane %v483, %v535
        %538 = vbcast.lane.b32.xlu0 %v536, 256
        %v539 = vpop.permute.xlu0 %538
        %v540 = vlaneseq
        %v541 = vshrl.u32 %v540, 7
        %v542 = vsub.s32 5, %v541
        %v543 = vrot.slane %v483, %v542
        %545 = vbcast.lane.b32.xlu0 %v543, 256
        %v546 = vpop.permute.xlu0 %545
        %v547 = vlaneseq
        %v548 = vshrl.u32 %v547, 7
        %v549 = vsub.s32 6, %v548
        %v550 = vrot.slane %v483, %v549
        %552 = vbcast.lane.b32.xlu0 %v550, 256
        %v553 = vpop.permute.xlu0 %552
        %v554 = vlaneseq
        %v555 = vshrl.u32 %v554, 7
        %v556 = vsub.s32 7, %v555
        %v557 = vrot.slane %v483, %v556
        %559 = vbcast.lane.b32.xlu0 %v557, 256
        %v560 = vpop.permute.xlu0 %559
        %v561 = vmul.f32 %v511, %v350
        %v562 = vmul.f32 %v518, %v351
        %v563 = vmul.f32 %v525, %v352
        %v564 = vmul.f32 %v532, %v353
        %v565 = vmul.f32 %v539, %v354
        %v566 = vmul.f32 %v546, %v355
        %v567 = vmul.f32 %v553, %v356
        %v568 = vmul.f32 %v560, %v357
        %v569 = vsel %vm373, %v561, 0.0
        %v570 = vsel %vm373, %v562, 0.0
        %v571 = vadd.f32 %v569, %v570
        %v572 = vsel %vm373, %v563, 0.0
        %v573 = vadd.f32 %v571, %v572
        %v574 = vsel %vm373, %v564, 0.0
        %v575 = vadd.f32 %v573, %v574
        %v576 = vsel %vm373, %v565, 0.0
        %v577 = vadd.f32 %v575, %v576
        %v578 = vsel %vm373, %v566, 0.0
        %v579 = vadd.f32 %v577, %v578
        %v580 = vsel %vm373, %v567, 0.0
        %v581 = vadd.f32 %v579, %v580
        %v582 = vsel %vm373, %v568, 0.0
        %v583 = vadd.f32 %v581, %v582
        %v584 = vadd.f32 %v504, %v583
        %585 = vst.msk [vmem:[#allocation4] sm:$0xff] %vm373, %v584
        %586 = vst.msk [vmem:[#allocation2] sm:$0x1] %vm494, %v471
        %p587 = scmp.eq.s32.totalorder %s31, 2
        // Predicated region
        $region61: #{tpu_custom_call.1} parent=51 // pred_check
          %p588 = pneg %p587
        $region62: #{tpu_custom_call.1} parent=51 // pred_check_branch
          %590 = sbr.rel (%p588) target = $region64
        $region63: #{tpu_custom_call.1} parent=51 // pred_region
          %v591 = vld [vmem:[#allocation3] sm:$0x1]
          %v592 = vrcp.pop %v591
          %v593 = vld [vmem:[#allocation4] sm:$0xff]
          %v594 = vlaneseq
          %v595 = vshrl.u32 %v594, 7
          %v596 = vsub.s32 0, %v595
          %v597 = vrot.slane %v592, %v596
          %599 = vbcast.lane.b32.xlu0 %v597, 256
          %v600 = vpop.permute.xlu0 %599
          %v601 = vmul.f32 %v593, %v600
          %v602 = vld [vmem:[%s2] sm:$0xff]
          %v603 = vld [vmem:[%s2 + $0x8] sm:$0xff]
          %v604 = vld [vmem:[%s2 + $0x10] sm:$0xff]
          %v605 = vld [vmem:[%s2 + $0x18] sm:$0xff]
          %v606 = vld [vmem:[%s3] sm:$0x1]
          %v608 = vlaneseq
          %v609 = vshrl.u32 %v608, 7
          %v610 = vsub.s32 0, %v609
          %v611 = vrot.slane %v606, %v610
          %v614 = vsel %vm373, %v601, 0
          %616 = vmatprep.subr.mxu0 0.0
          %617 = vmatpush1.msra.mxu0 0.0
          %618 = vmatprep.subr.mxu0 0.0
          %619 = vmatpush1.msra.mxu0 0.0
          %620 = vmatprep.subr.mxu0 0.0
          %621 = vmatpush1.msra.mxu0 0.0
          %622 = vmatprep.subr.mxu0 0.0
          %623 = vmatpush1.msra.mxu0 0.0
          %624 = vmatprep.subr.mxu0 0.0
          %625 = vmatpush1.msra.mxu0 0.0
          %626 = vmatprep.subr.mxu0 0.0
          %627 = vmatpush1.msra.mxu0 0.0
          %628 = vmatprep.subr.mxu0 0.0
          %629 = vmatpush1.msra.mxu0 0.0
          %630 = vmatprep.subr.mxu0 0.0
          %631 = vmatpush1.msra.mxu0 0.0
          %632 = vmatprep.subr.mxu0 0.0
          %633 = vmatpush1.msra.mxu0 0.0
          %634 = vmatprep.subr.mxu0 0.0
          %635 = vmatpush1.msra.mxu0 0.0
          %636 = vmatprep.subr.mxu0 0.0
          %637 = vmatpush1.msra.mxu0 0.0
          %638 = vmatprep.subr.mxu0 0.0
          %639 = vmatpush1.msra.mxu0 0.0
          %640 = vmatprep.subr.mxu0 0.0
          %641 = vmatpush1.msra.mxu0 %v605
          %642 = vmatprep.subr.mxu0 0.0
          %643 = vmatpush1.msra.mxu0 %v604
          %644 = vmatprep.subr.mxu0 0.0
          %645 = vmatpush1.msra.mxu0 %v603
          %646 = vmatprep.subr.mxu0 0.0
          %647 = vmatpush1.msra.mxu0 %v602
          %648 = vmatprep.subr.mxu0 0.0
          %649 = vmatpush2.msra.mxu0 0.0
          %650 = vmatprep.subr.mxu0 0.0
          %651 = vmatpush2.msra.mxu0 0.0
          %652 = vmatprep.subr.mxu0 0.0
          %653 = vmatpush2.msra.mxu0 0.0
          %654 = vmatprep.subr.mxu0 0.0
          %655 = vmatpush2.msra.mxu0 0.0
          %656 = vmatprep.subr.mxu0 0.0
          %657 = vmatpush2.msra.mxu0 0.0
          %658 = vmatprep.subr.mxu0 0.0
          %659 = vmatpush2.msra.mxu0 0.0
          %660 = vmatprep.subr.mxu0 0.0
          %661 = vmatpush2.msra.mxu0 0.0
          %662 = vmatprep.subr.mxu0 0.0
          %663 = vmatpush2.msra.mxu0 0.0
          %664 = vmatprep.subr.mxu0 0.0
          %665 = vmatpush2.msra.mxu0 0.0
          %666 = vmatprep.subr.mxu0 0.0
          %667 = vmatpush2.msra.mxu0 0.0
          %668 = vmatprep.subr.mxu0 0.0
          %669 = vmatpush2.msra.mxu0 0.0
          %670 = vmatprep.subr.mxu0 0.0
          %671 = vmatpush2.msra.mxu0 0.0
          %672 = vmatprep.subr.mxu0 0.0
          %673 = vmatpush2.msra.mxu0 0.0
          %674 = vmatprep.subr.mxu0 0.0
          %675 = vmatpush2.msra.mxu0 0.0
          %676 = vmatprep.subr.mxu0 0.0
          %677 = vmatpush2.msra.mxu0 0.0
          %678 = vmatprep.subr.mxu0 0.0
          %679 = vmatpush2.msra.mxu0 0.0
          %680 = vmatprep.mubr.f32.mxu0 0.0
          %681 = vmatmul.mubr.f32.gmra.mxu0 %v614
          %v682 = vpop.f32.mrf.mxu0
          %v683 = vadd.f32 %v611, %v682
          %v684 = vpop.f32.mrf.mxu0
          %685 = vdwg.mxu0
          %vm686 = vcmp.gt.f32.partialorder %v683, 0.0
          %v687 = vmul.f32 %v683, 0.01
          %v688 = vsel %vm686, %v683, %v687
          %v689 = vld [vmem:[%s4] sm:$0xff]
          %v690 = vld [vmem:[%s4 + $0x8] sm:$0xff]
          %v691 = vld [vmem:[%s4 + $0x10] sm:$0xff]
          %v692 = vld [vmem:[%s4 + $0x18] sm:$0xff]
          %v693 = vld [vmem:[%s5] sm:$0x1]
          %v695 = vlaneseq
          %v696 = vshrl.u32 %v695, 7
          %v697 = vsub.s32 0, %v696
          %v698 = vrot.slane %v693, %v697
          %v701 = vsel %vm373, %v688, 0
          %703 = vmatprep.subr.mxu0 0.0
          %704 = vmatpush1.msra.mxu0 0.0
          %705 = vmatprep.subr.mxu0 0.0
          %706 = vmatpush1.msra.mxu0 0.0
          %707 = vmatprep.subr.mxu0 0.0
          %708 = vmatpush1.msra.mxu0 0.0
          %709 = vmatprep.subr.mxu0 0.0
          %710 = vmatpush1.msra.mxu0 0.0
          %711 = vmatprep.subr.mxu0 0.0
          %712 = vmatpush1.msra.mxu0 0.0
          %713 = vmatprep.subr.mxu0 0.0
          %714 = vmatpush1.msra.mxu0 0.0
          %715 = vmatprep.subr.mxu0 0.0
          %716 = vmatpush1.msra.mxu0 0.0
          %717 = vmatprep.subr.mxu0 0.0
          %718 = vmatpush1.msra.mxu0 0.0
          %719 = vmatprep.subr.mxu0 0.0
          %720 = vmatpush1.msra.mxu0 0.0
          %721 = vmatprep.subr.mxu0 0.0
          %722 = vmatpush1.msra.mxu0 0.0
          %723 = vmatprep.subr.mxu0 0.0
          %724 = vmatpush1.msra.mxu0 0.0
          %725 = vmatprep.subr.mxu0 0.0
          %726 = vmatpush1.msra.mxu0 0.0
          %727 = vmatprep.subr.mxu0 0.0
          %728 = vmatpush1.msra.mxu0 %v692
          %729 = vmatprep.subr.mxu0 0.0
          %730 = vmatpush1.msra.mxu0 %v691
          %731 = vmatprep.subr.mxu0 0.0
          %732 = vmatpush1.msra.mxu0 %v690
          %733 = vmatprep.subr.mxu0 0.0
          %734 = vmatpush1.msra.mxu0 %v689
          %735 = vmatprep.subr.mxu0 0.0
          %736 = vmatpush2.msra.mxu0 0.0
          %737 = vmatprep.subr.mxu0 0.0
          %738 = vmatpush2.msra.mxu0 0.0
          %739 = vmatprep.subr.mxu0 0.0
          %740 = vmatpush2.msra.mxu0 0.0
          %741 = vmatprep.subr.mxu0 0.0
          %742 = vmatpush2.msra.mxu0 0.0
          %743 = vmatprep.subr.mxu0 0.0
          %744 = vmatpush2.msra.mxu0 0.0
          %745 = vmatprep.subr.mxu0 0.0
          %746 = vmatpush2.msra.mxu0 0.0
          %747 = vmatprep.subr.mxu0 0.0
          %748 = vmatpush2.msra.mxu0 0.0
          %749 = vmatprep.subr.mxu0 0.0
          %750 = vmatpush2.msra.mxu0 0.0
          %751 = vmatprep.subr.mxu0 0.0
          %752 = vmatpush2.msra.mxu0 0.0
          %753 = vmatprep.subr.mxu0 0.0
          %754 = vmatpush2.msra.mxu0 0.0
          %755 = vmatprep.subr.mxu0 0.0
          %756 = vmatpush2.msra.mxu0 0.0
          %757 = vmatprep.subr.mxu0 0.0
          %758 = vmatpush2.msra.mxu0 0.0
          %759 = vmatprep.subr.mxu0 0.0
          %760 = vmatpush2.msra.mxu0 0.0
          %761 = vmatprep.subr.mxu0 0.0
          %762 = vmatpush2.msra.mxu0 0.0
          %763 = vmatprep.subr.mxu0 0.0
          %764 = vmatpush2.msra.mxu0 0.0
          %765 = vmatprep.subr.mxu0 0.0
          %766 = vmatpush2.msra.mxu0 0.0
          %767 = vmatprep.mubr.f32.mxu0 0.0
          %768 = vmatmul.mubr.f32.gmra.mxu0 %v701
          %v769 = vpop.f32.mrf.mxu0
          %v770 = vadd.f32 %v698, %v769
          %v771 = vpop.f32.mrf.mxu0
          %772 = vdwg.mxu0
          %vm773 = vcmp.gt.f32.partialorder %v770, 0.0
          %v774 = vmul.f32 %v770, 0.01
          %v775 = vsel %vm773, %v770, %v774
          %v776 = vld [vmem:[%s6] sm:$0x1]
          %v778 = vlaneseq
          %v779 = vshrl.u32 %v778, 7
          %v780 = vsub.s32 0, %v779
          %v781 = vrot.slane %v776, %v780
          %v783 = vmul.f32 %v775, %v781
          %vm784 = vcmask 130048
          %v785 = vsel %vm784, %v783, 0.0
          %786 = vadd.xlane.f32.xlu0 %v785
          %v787 = vpop.xlane.xlu0 %786
          %s788 = sld [smem:[#allocation5]]
          %v789 = vstv %s788
          %v790 = vadd.f32 %v787, %v789
          %v792 = vlaneseq
          %v793 = vshrl.u32 %v792, 7
          %v794 = vsub.s32 %v413, %v793
          %v795 = vrot.slane %v790, %v794
          %797 = vst.msk [vmem:[%s339] sm:$0x1] %vm494, %v795
        $region64: #{tpu_custom_call.1} parent=51 // pred_fallthru
          _
        %s798 = sand.u32 %s221, 1
        %s799 = scalar_lea.sflag [#allocation8], %s798
        %s800 = sand.u32 %s221, 1
        %s801 = scalar_lea.vmem [#allocation9], %s800
        // Predicated region
        $region65: #{tpu_custom_call.1} parent=51 // pred_check
          %p802 = pneg %p231
        $region66: #{tpu_custom_call.1} parent=51 // pred_check_branch
          %804 = sbr.rel (%p802) target = $region68
        $region67: #{tpu_custom_call.1} parent=51 // pred_region
          %s806 = ssub.s32 16, 16
          %807 = vsyncadd %s799, %s806
          %s808 = smul.addr %s30, 16
          %s809 = scalar_lea.hbm %s8, %s808
          %s811 = sshll.u32 %s801, 4
          %s812 = int_to_ptr.vmem [resolvable:$true] %s811
          %814 = dma.vmem_to_hbm [thread:$0]  %s812, 16, %s809, %s799
        $region68: #{tpu_custom_call.1} parent=51 // pred_fallthru
          _
      $region52: #{tpu_custom_call.1} parent=5 // pred_fallthru
        _
      %p815 = scmp.le.s32.totalorder 2, %s21
      // Predicated region
      $region69: #{tpu_custom_call.1} parent=5 // pred_check
        %p816 = pneg %p815
      $region70: #{tpu_custom_call.1} parent=5 // pred_check_branch
        %818 = sbr.rel (%p816) target = $region72
      $region71: #{tpu_custom_call.1} parent=5 // pred_region
        %s819 = ssub.s32 %s21, 2
        // Predicated region
        $region73: #{tpu_custom_call.1} parent=71 // pred_check
          %p820 = pneg %p237
        $region74: #{tpu_custom_call.1} parent=71 // pred_check_branch
          %822 = sbr.rel (%p820) target = $region76
        $region75: #{tpu_custom_call.1} parent=71 // pred_region
          %s823 = sand.u32 %s222, 1
          %s824 = scalar_lea.sflag [#allocation8], %s823
          %s825 = sand.u32 %s222, 1
          %s826 = scalar_lea.vmem [#allocation9], %s825
          %827 = dma.done %s824, 16
        $region76: #{tpu_custom_call.1} parent=71 // pred_fallthru
          _
      $region72: #{tpu_custom_call.1} parent=5 // pred_fallthru
        _
    $region6: #{tpu_custom_call.1} parent=1 // loop_footer
      %s25 = sadd.s32 1, %s21
    $region7: #{tpu_custom_call.1} parent=1 // loop_footer_branch
      %20 = sbr.rel target = $region3
    $region8: #{tpu_custom_call.1} parent=1 // loop_exit
      _
    %828 = vsyncpa [#allocation7], 1
    %s829 = scalar_lea.sflag [#allocation7], 1
    %830 = vsyncpa %s829, 1
    %831 = vsyncpa [#allocation8], 1
    %s832 = scalar_lea.sflag [#allocation8], 1
    %833 = vsyncpa %s832, 1

// kernel: tpu_custom_call.1
$region0: #{tpu_custom_call.1}
  #allocation0 [shape = 'u32[]', space=smem, size = 0x4, offset = 0x4, fixed_abs, tag = 'smem constant byte address 0x4 - core index']
  #allocation1 [shape = 'u32[144,128]{1,0:T(1,128)}', space=vmem, size = 0x12000, scoped, tag = 'internal scratch']
  #allocation2 [shape = 'f32[1,8]{1,0:T(1,128)}', space=vmem, size = 0x200, scoped, tag = 'scratch operand']
  #allocation3 [shape = 'f32[1,8]{1,0:T(1,128)}', space=vmem, size = 0x200, scoped, tag = 'scratch operand']
  #allocation4 [shape = 'f32[8,32]{1,0:T(8,128)}', space=vmem, size = 0x1000, scoped, tag = 'scratch operand']
  #allocation5 [shape = 'f32[1]{0:T(128)S(6)}', space=smem, size = 0x200, scoped, tag = 'scoped memory for tpu_custom_call.1']
  %s0 = inlined_call_operand.hbm [shape: f32[24,16,32], index: 0, kind: input, shape index: {}]
  %s1 = inlined_call_operand.vmem [shape: f32[1,32], index: 1, kind: input, shape index: {}]
  %s2 = inlined_call_operand.vmem [shape: f32[32,32], index: 2, kind: input, shape index: {}]
  %s3 = inlined_call_operand.vmem [shape: f32[1,32], index: 3, kind: input, shape index: {}]
  %s4 = inlined_call_operand.vmem [shape: f32[32,16], index: 4, kind: input, shape index: {}]
  %s5 = inlined_call_operand.vmem [shape: f32[1,16], index: 5, kind: input, shape index: {}]
  %s6 = inlined_call_operand.vmem [shape: f32[1,16], index: 6, kind: input, shape index: {}]
  %s7 = inlined_call_operand.<no memory space> [shape: f32[1], index: 7, kind: input, shape index: {}]
  %s8 = inlined_call_operand.hbm [shape: f32[2,1,8], index: 8, kind: output, shape index: {}]
  %s9 = sld [smem:[#allocation0]]
  $region77: #{tpu_custom_call.1} parent=0
    _
  %s11 = ssub.s32 1, %s9
  %s12 = scalar_select 0, %s11, %s9
  %13 = sst [smem:[#allocation5]] %s7
  $region1: #{tpu_custom_call.1} parent=0
    #allocation6 [shape = 'u8[65536]{0}', space=vmem, size = 0x10000, scoped, tag = 'input window, operand 0']
    #allocation7 [shape = 's32[2]{0}', space=sflag, size = 0x8, scoped, tag = 'scoped memory for tpu_custom_call.1']
    #allocation8 [shape = 's32[2]{0}', space=sflag, size = 0x8, scoped, tag = 'scoped memory for tpu_custom_call.1']
    #allocation9 [shape = 'u8[1024]{0}', space=vmem, size = 0x400, scoped, tag = 'output window, operand 0']
    %14 = vsyncpa [#allocation7], 0
    %s15 = scalar_lea.sflag [#allocation7], 1
    %16 = vsyncpa %s15, 0
    %17 = vsyncpa [#allocation8], 0
    %s18 = scalar_lea.sflag [#allocation8], 1
    %19 = vsyncpa %s18, 0
    loop: start=0, step=1, limit=8
    $region2: #{tpu_custom_call.1} parent=1 // loop_pre_header
      _
    $region3: #{tpu_custom_call.1} parent=1 // loop_header
      %s21 = sphi 0, %s25
      %p22 = scmp.ge.s32.totalorder %s21, 8
      %s28 = sphi 0, %s40
      %s29 = sphi 0, %s36
      %s30 = sphi 0, %s28
      %s31 = sphi 0, %s29
      %s32 = sphi 0, %s30
      %s33 = sphi 0, %s31
      %s45 = sphi 0, %s47
      %s48 = sphi 0, %s45
      %s49 = sphi 0, %s48
      %s65 = sphi 0, %s49
      %s69 = sphi 0, %s69
      %s71 = sphi 0, %s69
      %s72 = sphi 0, %s71
      %s86 = sphi 0, %s72
      %s90 = sphi 0, %s90
      %s92 = sphi 0, %s90
      %s93 = sphi 0, %s92
      %s107 = sphi 0, %s93
      %s111 = sphi 0, %s111
      %s113 = sphi 0, %s111
      %s114 = sphi 0, %s113
      %s128 = sphi 0, %s114
      %s132 = sphi 0, %s132
      %s134 = sphi 0, %s132
      %s135 = sphi 0, %s134
      %s149 = sphi 0, %s135
      %s153 = sphi 0, %s153
      %s155 = sphi 0, %s153
      %s156 = sphi 0, %s155
      %s170 = sphi 0, %s156
      %s174 = sphi 0, %s174
      %s176 = sphi 0, %s174
      %s177 = sphi 0, %s176
      %s191 = sphi 0, %s177
      %s195 = sphi 0, %s195
      %s197 = sphi 0, %s195
      %s198 = sphi 0, %s197
      %s212 = sphi 0, %s198
      %s218 = sphi 0, %s220
      %s221 = sphi 0, %s218
      %s222 = sphi 0, %s221
      %s238 = sphi 0, %s222
    $region4: #{tpu_custom_call.1} parent=1 // loop_header_branch
      %24 = sbr.rel (%p22) target = $region8
    $region5: #{tpu_custom_call.1} parent=1 // loop_body
      %s26 = ssub.s32 %s21, 1
      %s27 = ssub.s32 %s21, 2
      %s34 = sadd.s32 1, %s29
      %p35 = scmp.ge.s32.totalorder %s34, 3
      %s36 = scalar_select %p35, 0, %s34
      %s37 = sadd.s32 1, %s28
      %s38 = scalar_select %p35, %s37, %s28
      %p39 = scmp.ge.s32.totalorder %s38, 2
      %s40 = scalar_select %p39, 0, %s38
      %s41 = ssub.s32 %s29, %s36
      %s42 = ssub.s32 %s28, %s40
      %s43 = sor.u32 %s41, %s42
      %p44 = scmp.eq.s32.totalorder %s43, 0
      %s46 = sadd.s32 %s45, 1
      %s47 = scalar_select %p44, %s45, %s46
      %p50 = pneg %p44
      %p51 = scmp.eq.s32.totalorder %s21, 5
      %p52 = por %p50, %p51
      %p53 = scmp.ne.s32.totalorder %s45, %s48
      %p54 = scmp.eq.s32.totalorder %s21, 0
      %p55 = por %p53, %p54
      %p56 = scmp.ne.s32.totalorder %s45, %s48
      %p57 = scmp.eq.s32.totalorder %s26, 5
      %p58 = por %p56, %p57
      %p59 = scmp.ne.s32.totalorder %s48, %s49
      %p60 = scmp.eq.s32.totalorder %s26, 0
      %p61 = por %p59, %p60
      %p62 = scmp.ne.s32.totalorder %s48, %s49
      %p63 = scmp.eq.s32.totalorder %s27, 5
      %p64 = por %p62, %p63
      %p66 = scmp.ne.s32.totalorder %s49, %s65
      %p67 = scmp.eq.s32.totalorder %s27, 0
      %p68 = por %p66, %p67
      %s70 = sadd.s32 %s69, 1
      %p73 = scmp.eq.s32.totalorder %s21, 5
      %p74 = scmp.ne.s32.totalorder %s69, %s71
      %p75 = scmp.eq.s32.totalorder %s21, 0
      %p76 = por %p74, %p75
      %p77 = scmp.ne.s32.totalorder %s69, %s71
      %p78 = scmp.eq.s32.totalorder %s26, 5
      %p79 = por %p77, %p78
      %p80 = scmp.ne.s32.totalorder %s71, %s72
      %p81 = scmp.eq.s32.totalorder %s26, 0
      %p82 = por %p80, %p81
      %p83 = scmp.ne.s32.totalorder %s71, %s72
      %p84 = scmp.eq.s32.totalorder %s27, 5
      %p85 = por %p83, %p84
      %p87 = scmp.ne.s32.totalorder %s72, %s86
      %p88 = scmp.eq.s32.totalorder %s27, 0
      %p89 = por %p87, %p88
      %s91 = sadd.s32 %s90, 1
      %p94 = scmp.eq.s32.totalorder %s21, 5
      %p95 = scmp.ne.s32.totalorder %s90, %s92
      %p96 = scmp.eq.s32.totalorder %s21, 0
      %p97 = por %p95, %p96
      %p98 = scmp.ne.s32.totalorder %s90, %s92
      %p99 = scmp.eq.s32.totalorder %s26, 5
      %p100 = por %p98, %p99
      %p101 = scmp.ne.s32.totalorder %s92, %s93
      %p102 = scmp.eq.s32.totalorder %s26, 0
      %p103 = por %p101, %p102
      %p104 = scmp.ne.s32.totalorder %s92, %s93
      %p105 = scmp.eq.s32.totalorder %s27, 5
      %p106 = por %p104, %p105
      %p108 = scmp.ne.s32.totalorder %s93, %s107
      %p109 = scmp.eq.s32.totalorder %s27, 0
      %p110 = por %p108, %p109
      %s112 = sadd.s32 %s111, 1
      %p115 = scmp.eq.s32.totalorder %s21, 5
      %p116 = scmp.ne.s32.totalorder %s111, %s113
      %p117 = scmp.eq.s32.totalorder %s21, 0
      %p118 = por %p116, %p117
      %p119 = scmp.ne.s32.totalorder %s111, %s113
      %p120 = scmp.eq.s32.totalorder %s26, 5
      %p121 = por %p119, %p120
      %p122 = scmp.ne.s32.totalorder %s113, %s114
      %p123 = scmp.eq.s32.totalorder %s26, 0
      %p124 = por %p122, %p123
      %p125 = scmp.ne.s32.totalorder %s113, %s114
      %p126 = scmp.eq.s32.totalorder %s27, 5
      %p127 = por %p125, %p126
      %p129 = scmp.ne.s32.totalorder %s114, %s128
      %p130 = scmp.eq.s32.totalorder %s27, 0
      %p131 = por %p129, %p130
      %s133 = sadd.s32 %s132, 1
      %p136 = scmp.eq.s32.totalorder %s21, 5
      %p137 = scmp.ne.s32.totalorder %s132, %s134
      %p138 = scmp.eq.s32.totalorder %s21, 0
      %p139 = por %p137, %p138
      %p140 = scmp.ne.s32.totalorder %s132, %s134
      %p141 = scmp.eq.s32.totalorder %s26, 5
      %p142 = por %p140, %p141
      %p143 = scmp.ne.s32.totalorder %s134, %s135
      %p144 = scmp.eq.s32.totalorder %s26, 0
      %p145 = por %p143, %p144
      %p146 = scmp.ne.s32.totalorder %s134, %s135
      %p147 = scmp.eq.s32.totalorder %s27, 5
      %p148 = por %p146, %p147
      %p150 = scmp.ne.s32.totalorder %s135, %s149
      %p151 = scmp.eq.s32.totalorder %s27, 0
      %p152 = por %p150, %p151
      %s154 = sadd.s32 %s153, 1
      %p157 = scmp.eq.s32.totalorder %s21, 5
      %p158 = scmp.ne.s32.totalorder %s153, %s155
      %p159 = scmp.eq.s32.totalorder %s21, 0
      %p160 = por %p158, %p159
      %p161 = scmp.ne.s32.totalorder %s153, %s155
      %p162 = scmp.eq.s32.totalorder %s26, 5
      %p163 = por %p161, %p162
      %p164 = scmp.ne.s32.totalorder %s155, %s156
      %p165 = scmp.eq.s32.totalorder %s26, 0
      %p166 = por %p164, %p165
      %p167 = scmp.ne.s32.totalorder %s155, %s156
      %p168 = scmp.eq.s32.totalorder %s27, 5
      %p169 = por %p167, %p168
      %p171 = scmp.ne.s32.totalorder %s156, %s170
      %p172 = scmp.eq.s32.totalorder %s27, 0
      %p173 = por %p171, %p172
      %s175 = sadd.s32 %s174, 1
      %p178 = scmp.eq.s32.totalorder %s21, 5
      %p179 = scmp.ne.s32.totalorder %s174, %s176
      %p180 = scmp.eq.s32.totalorder %s21, 0
      %p181 = por %p179, %p180
      %p182 = scmp.ne.s32.totalorder %s174, %s176
      %p183 = scmp.eq.s32.totalorder %s26, 5
      %p184 = por %p182, %p183
      %p185 = scmp.ne.s32.totalorder %s176, %s177
      %p186 = scmp.eq.s32.totalorder %s26, 0
      %p187 = por %p185, %p186
      %p188 = scmp.ne.s32.totalorder %s176, %s177
      %p189 = scmp.eq.s32.totalorder %s27, 5
      %p190 = por %p188, %p189
      %p192 = scmp.ne.s32.totalorder %s177, %s191
      %p193 = scmp.eq.s32.totalorder %s27, 0
      %p194 = por %p192, %p193
      %s196 = sadd.s32 %s195, 1
      %p199 = scmp.eq.s32.totalorder %s21, 5
      %p200 = scmp.ne.s32.totalorder %s195, %s197
      %p201 = scmp.eq.s32.totalorder %s21, 0
      %p202 = por %p200, %p201
      %p203 = scmp.ne.s32.totalorder %s195, %s197
      %p204 = scmp.eq.s32.totalorder %s26, 5
      %p205 = por %p203, %p204
      %p206 = scmp.ne.s32.totalorder %s197, %s198
      %p207 = scmp.eq.s32.totalorder %s26, 0
      %p208 = por %p206, %p207
      %p209 = scmp.ne.s32.totalorder %s197, %s198
      %p210 = scmp.eq.s32.totalorder %s27, 5
      %p211 = por %p209, %p210
      %p213 = scmp.ne.s32.totalorder %s198, %s212
      %p214 = scmp.eq.s32.totalorder %s27, 0
      %p215 = por %p213, %p214
      %s216 = ssub.s32 %s28, %s40
      %p217 = scmp.eq.s32.totalorder %s216, 0
      %s219 = sadd.s32 %s218, 1
      %s220 = scalar_select %p217, %s218, %s219
      %p223 = pneg %p217
      %p224 = scmp.eq.s32.totalorder %s21, 5
      %p225 = por %p223, %p224
      %p226 = scmp.ne.s32.totalorder %s218, %s221
      %p227 = scmp.eq.s32.totalorder %s21, 0
      %p228 = por %p226, %p227
      %p229 = scmp.ne.s32.totalorder %s218, %s221
      %p230 = scmp.eq.s32.totalorder %s26, 5
      %p231 = por %p229, %p230
      %p232 = scmp.ne.s32.totalorder %s221, %s222
      %p233 = scmp.eq.s32.totalorder %s26, 0
      %p234 = por %p232, %p233
      %p235 = scmp.ne.s32.totalorder %s221, %s222
      %p236 = scmp.eq.s32.totalorder %s27, 5
      %p237 = por %p235, %p236
      %p239 = scmp.ne.s32.totalorder %s222, %s238
      %p240 = scmp.eq.s32.totalorder %s27, 0
      %p241 = por %p239, %p240
      %p242 = scmp.le.s32.totalorder 1, %s21
      %p243 = scmp.lt.s32.totalorder %s21, 7
      %p244 = pnand %p242, %p243
      %p245 = pneg %p244
      // Predicated region
      $region9: #{tpu_custom_call.1} parent=5 // pred_check
        _
      $region10: #{tpu_custom_call.1} parent=5 // pred_check_branch
        %247 = sbr.rel (%p244) target = $region12
      $region11: #{tpu_custom_call.1} parent=5 // pred_region
        %s248 = ssub.s32 %s21, 1
        // Predicated region
        $region13: #{tpu_custom_call.1} parent=11 // pred_check
          %p249 = pneg %p82
        $region14: #{tpu_custom_call.1} parent=11 // pred_check_branch
          %251 = sbr.rel (%p249) target = $region16
        $region15: #{tpu_custom_call.1} parent=11 // pred_region
          _
        $region16: #{tpu_custom_call.1} parent=11 // pred_fallthru
          _
        // Predicated region
        $region17: #{tpu_custom_call.1} parent=11 // pred_check
          %p252 = pneg %p103
        $region18: #{tpu_custom_call.1} parent=11 // pred_check_branch
          %254 = sbr.rel (%p252) target = $region20
        $region19: #{tpu_custom_call.1} parent=11 // pred_region
          _
        $region20: #{tpu_custom_call.1} parent=11 // pred_fallthru
          _
        // Predicated region
        $region21: #{tpu_custom_call.1} parent=11 // pred_check
          %p255 = pneg %p124
        $region22: #{tpu_custom_call.1} parent=11 // pred_check_branch
          %257 = sbr.rel (%p255) target = $region24
        $region23: #{tpu_custom_call.1} parent=11 // pred_region
          _
        $region24: #{tpu_custom_call.1} parent=11 // pred_fallthru
          _
        // Predicated region
        $region25: #{tpu_custom_call.1} parent=11 // pred_check
          %p258 = pneg %p145
        $region26: #{tpu_custom_call.1} parent=11 // pred_check_branch
          %260 = sbr.rel (%p258) target = $region28
        $region27: #{tpu_custom_call.1} parent=11 // pred_region
          _
        $region28: #{tpu_custom_call.1} parent=11 // pred_fallthru
          _
        // Predicated region
        $region29: #{tpu_custom_call.1} parent=11 // pred_check
          %p261 = pneg %p166
        $region30: #{tpu_custom_call.1} parent=11 // pred_check_branch
          %263 = sbr.rel (%p261) target = $region32
        $region31: #{tpu_custom_call.1} parent=11 // pred_region
          _
        $region32: #{tpu_custom_call.1} parent=11 // pred_fallthru
          _
        // Predicated region
        $region33: #{tpu_custom_call.1} parent=11 // pred_check
          %p264 = pneg %p187
        $region34: #{tpu_custom_call.1} parent=11 // pred_check_branch
          %266 = sbr.rel (%p264) target = $region36
        $region35: #{tpu_custom_call.1} parent=11 // pred_region
          _
        $region36: #{tpu_custom_call.1} parent=11 // pred_fallthru
          _
        // Predicated region
        $region37: #{tpu_custom_call.1} parent=11 // pred_check
          %p267 = pneg %p208
        $region38: #{tpu_custom_call.1} parent=11 // pred_check_branch
          %269 = sbr.rel (%p267) target = $region40
        $region39: #{tpu_custom_call.1} parent=11 // pred_region
          _
        $region40: #{tpu_custom_call.1} parent=11 // pred_fallthru
          _
      $region12: #{tpu_custom_call.1} parent=5 // pred_fallthru
        _
      %p270 = scmp.lt.s32.totalorder %s21, 6
      // Predicated region
      $region41: #{tpu_custom_call.1} parent=5 // pred_check
        %p271 = pneg %p270
      $region42: #{tpu_custom_call.1} parent=5 // pred_check_branch
        %273 = sbr.rel (%p271) target = $region44
      $region43: #{tpu_custom_call.1} parent=5 // pred_region
        // Predicated region
        $region45: #{tpu_custom_call.1} parent=43 // pred_check
          %p274 = pneg %p55
        $region46: #{tpu_custom_call.1} parent=43 // pred_check_branch
          %276 = sbr.rel (%p274) target = $region48
        $region47: #{tpu_custom_call.1} parent=43 // pred_region
          %s277 = sand.u32 %s45, 1
          %s278 = scalar_lea.sflag [#allocation7], %s277
          %s279 = sand.u32 %s45, 1
          %s280 = smul.addr %s279, 64
          %s281 = scalar_lea.vmem [#allocation6], %s280
          %s282 = smul.u32 8, %s29
          %s284 = ssub.s32 1024, 1024
          %285 = vsyncadd %s278, %s284
          %s286 = smul.addr %s282, 2
          %s287 = sadd.s32 %s28, %s286
          %s288 = smul.addr %s287, 128
          %s289 = scalar_lea.hbm %s0, %s288
          %s290 = sshll.u32 %s281, 4
          %s291 = int_to_ptr.vmem [resolvable:$true] %s290
          %296 = dma.hbm_to_vmem [thread:$0]  %s289, 1024, %s291, %s278, 256, 128, 8
        $region48: #{tpu_custom_call.1} parent=43 // pred_fallthru
          _
      $region44: #{tpu_custom_call.1} parent=5 // pred_fallthru
        _
      %p297 = scmp.le.s32.totalorder 1, %s21
      %p298 = scmp.lt.s32.totalorder %s21, 7
      %p299 = pnand %p297, %p298
      %p300 = pneg %p299
      // Predicated region
      $region49: #{tpu_custom_call.1} parent=5 // pred_check
        _
      $region50: #{tpu_custom_call.1} parent=5 // pred_check_branch
        %302 = sbr.rel (%p299) target = $region52
      $region51: #{tpu_custom_call.1} parent=5 // pred_region
        %s303 = ssub.s32 %s21, 1
        %s304 = sand.u32 %s48, 1
        %s305 = scalar_lea.sflag [#allocation7], %s304
        %s306 = sand.u32 %s48, 1
        %s307 = smul.addr %s306, 64
        %s308 = scalar_lea.vmem [#allocation6], %s307
        // Predicated region
        $region53: #{tpu_custom_call.1} parent=51 // pred_check
          %p309 = pneg %p61
        $region54: #{tpu_custom_call.1} parent=51 // pred_check_branch
          %311 = sbr.rel (%p309) target = $region56
        $region55: #{tpu_custom_call.1} parent=51 // pred_region
          %312 = dma.done %s305, 1024
        $region56: #{tpu_custom_call.1} parent=51 // pred_fallthru
          _
        %s313 = sand.u32 %s48, 1
        %s314 = scalar_lea.sflag [#allocation7], %s313
        %s315 = sand.u32 %s48, 1
        %s316 = smul.addr %s315, 64
        %s317 = scalar_lea.vmem [#allocation6], %s316
        %p318 = pneg %p61
        %p319 = pneg %p58
        %p320 = pneg %p82
        %p321 = pneg %p79
        %p322 = pneg %p103
        %p323 = pneg %p100
        %p324 = pneg %p124
        %p325 = pneg %p121
        %p326 = pneg %p145
        %p327 = pneg %p142
        %p328 = pneg %p166
        %p329 = pneg %p163
        %p330 = pneg %p187
        %p331 = pneg %p184
        %p332 = pneg %p208
        %p333 = pneg %p205
        %p334 = pneg %p234
        %p335 = pneg %p231
        %s336 = sand.u32 %s221, 1
        %s337 = scalar_lea.sflag [#allocation8], %s336
        %s338 = sand.u32 %s221, 1
        %s339 = scalar_lea.vmem [#allocation9], %s338
        %s340 = smul.u32 8, %s31
        %p341 = scmp.eq.s32.totalorder %s31, 0
        // Predicated region
        $region57: #{tpu_custom_call.1} parent=51 // pred_check
          %p342 = pneg %p341
        $region58: #{tpu_custom_call.1} parent=51 // pred_check_branch
          %344 = sbr.rel (%p342) target = $region60
        $region59: #{tpu_custom_call.1} parent=51 // pred_region
          %vm345 = vcmask 57344
          %346 = vst.msk [vmem:[#allocation2] sm:$0x1] %vm345, -inf
          %347 = vst.msk [vmem:[#allocation3] sm:$0x1] %vm345, 0.0
          %vm348 = vcmask 261120
          %349 = vst.msk [vmem:[#allocation4] sm:$0xff] %vm348, 0.0
        $region60: #{tpu_custom_call.1} parent=51 // pred_fallthru
          _
        %v350 = vld [vmem:[%s308] sm:$0xff]
        %v351 = vld [vmem:[%s308 + $0x8] sm:$0xff]
        %v352 = vld [vmem:[%s308 + $0x10] sm:$0xff]
        %v353 = vld [vmem:[%s308 + $0x18] sm:$0xff]
        %v354 = vld [vmem:[%s308 + $0x20] sm:$0xff]
        %v355 = vld [vmem:[%s308 + $0x28] sm:$0xff]
        %v356 = vld [vmem:[%s308 + $0x30] sm:$0xff]
        %v357 = vld [vmem:[%s308 + $0x38] sm:$0xff]
        %v358 = vld [vmem:[%s1] sm:$0x1]
        %v360 = vlaneseq
        %v361 = vshrl.u32 %v360, 7
        %v362 = vsub.s32 0, %v361
        %v363 = vrot.slane %v358, %v362
        %v365 = vmul.f32 %v350, %v363
        %v366 = vmul.f32 %v351, %v363
        %v367 = vmul.f32 %v352, %v363
        %v368 = vmul.f32 %v353, %v363
        %v369 = vmul.f32 %v354, %v363
        %v370 = vmul.f32 %v355, %v363
        %v371 = vmul.f32 %v356, %v363
        %v372 = vmul.f32 %v357, %v363
        %vm373 = vcmask 261120
        %v374 = vsel %vm373, %v365, 0.0
        %375 = vadd.xlane.f32.xlu0 %v374
        %v376 = vpop.xlane.xlu0 %375
        %v377 = vsel %vm373, %v366, 0.0
        %378 = vadd.xlane.f32.xlu0 %v377
        %v379 = vpop.xlane.xlu0 %378
        %v380 = vsel %vm373, %v367, 0.0
        %381 = vadd.xlane.f32.xlu0 %v380
        %v382 = vpop.xlane.xlu0 %381
        %v383 = vsel %vm373, %v368, 0.0
        %384 = vadd.xlane.f32.xlu0 %v383
        %v385 = vpop.xlane.xlu0 %384
        %v386 = vsel %vm373, %v369, 0.0
        %387 = vadd.xlane.f32.xlu0 %v386
        %v388 = vpop.xlane.xlu0 %387
        %v389 = vsel %vm373, %v370, 0.0
        %390 = vadd.xlane.f32.xlu0 %v389
        %v391 = vpop.xlane.xlu0 %390
        %v392 = vsel %vm373, %v371, 0.0
        %393 = vadd.xlane.f32.xlu0 %v392
        %v394 = vpop.xlane.xlu0 %393
        %v395 = vsel %vm373, %v372, 0.0
        %396 = vadd.xlane.f32.xlu0 %v395
        %v397 = vpop.xlane.xlu0 %396
        %s398 = smul.u32 %s31, 8
        %v399 = vlaneseq
        %v400 = vshrl.u32 %v399, 7
        %v401 = vstv %s398
        %v402 = vadd.s32 %v401, %v400
        %vm403 = vcmp.lt.s32.totalorder %v402, 20
        %v412 = vlaneseq
        %v413 = vand.u32 %v412, 127
        %v414 = vlaneseq
        %v415 = vshrl.u32 %v414, 7
        %v416 = vsub.s32 %v413, %v415
        %v417 = vrot.slane %v376, %v416
        %v418 = vlaneseq
        %v419 = vshrl.u32 %v418, 7
        %v420 = vsub.s32 %v413, %v419
        %v421 = vrot.slane %v379, %v420
        %v422 = vlaneseq
        %v423 = vshrl.u32 %v422, 7
        %v424 = vsub.s32 %v413, %v423
        %v425 = vrot.slane %v382, %v424
        %v426 = vlaneseq
        %v427 = vshrl.u32 %v426, 7
        %v428 = vsub.s32 %v413, %v427
        %v429 = vrot.slane %v385, %v428
        %v430 = vlaneseq
        %v431 = vshrl.u32 %v430, 7
        %v432 = vsub.s32 %v413, %v431
        %v433 = vrot.slane %v388, %v432
        %v434 = vlaneseq
        %v435 = vshrl.u32 %v434, 7
        %v436 = vsub.s32 %v413, %v435
        %v437 = vrot.slane %v391, %v436
        %v438 = vlaneseq
        %v439 = vshrl.u32 %v438, 7
        %v440 = vsub.s32 %v413, %v439
        %v441 = vrot.slane %v394, %v440
        %v442 = vlaneseq
        %v443 = vshrl.u32 %v442, 7
        %v444 = vsub.s32 %v413, %v443
        %v445 = vrot.slane %v397, %v444
        %vm446 = vcmask 1041409
        %v447 = vsel %vm446, %v421, %v417
        %vm448 = vcmask 1042434
        %v449 = vsel %vm448, %v425, %v447
        %vm450 = vcmask 1043459
        %v451 = vsel %vm450, %v429, %v449
        %vm452 = vcmask 1044484
        %v453 = vsel %vm452, %v433, %v451
        %vm454 = vcmask 1045509
        %v455 = vsel %vm454, %v437, %v453
        %vm456 = vcmask 1046534
        %v457 = vsel %vm456, %v441, %v455
        %vm458 = vcmask 1047559
        %v459 = vsel %vm458, %v445, %v457
        %v461 = vsel %vm403, %v459, -inf
        %v462 = vld [vmem:[#allocation2] sm:$0x1]
        %vm463 = vcmask 64512
        %v464 = vsel %vm463, %v461, -inf
        %v465 = vrot.slane %v464, 4
        %v466 = vmax.f32 %v464, %v465
        %v467 = vrot.slane %v466, 2
        %v468 = vmax.f32 %v466, %v467
        %v469 = vrot.slane %v468, 1
        %v470 = vmax.f32 %v468, %v469
        %v471 = vmax.f32 %v462, %v470
        %v472 = vsub.f32 %v462, %v471
        %v473 = vmul.f32 %v472, 1.442695
        %v474 = vpow.pop %v473
        %v476 = vlaneseq
        %v477 = vshrl.u32 %v476, 7
        %v478 = vsub.s32 0, %v477
        %v479 = vrot.slane %v471, %v478
        %v481 = vsub.f32 %v461, %v479
        %v482 = vmul.f32 %v481, 1.442695
        %v483 = vpow.pop %v482
        %v484 = vld [vmem:[#allocation3] sm:$0x1]
        %v485 = vmul.f32 %v474, %v484
        %v486 = vsel %vm463, %v483, 0.0
        %v487 = vrot.slane %v486, 4
        %v488 = vadd.f32 %v486, %v487
        %v489 = vrot.slane %v488, 2
        %v490 = vadd.f32 %v488, %v489
        %v491 = vrot.slane %v490, 1
        %v492 = vadd.f32 %v490, %v491
        %v493 = vadd.f32 %v485, %v492
        %vm494 = vcmask 57344
        %495 = vst.msk [vmem:[#allocation3] sm:$0x1] %vm494, %v493
        %v496 = vlaneseq
        %v497 = vshrl.u32 %v496, 7
        %v498 = vsub.s32 0, %v497
        %v499 = vrot.slane %v474, %v498
        %501 = vbcast.lane.b32.xlu0 %v499, 256
        %v502 = vpop.permute.xlu0 %501
        %v503 = vld [vmem:[#allocation4] sm:$0xff]
        %v504 = vmul.f32 %v502, %v503
        %v505 = vlaneseq
        %v506 = vshrl.u32 %v505, 7
        %v507 = vsub.s32 0, %v506
        %v508 = vrot.slane %v483, %v507
        %510 = vbcast.lane.b32.xlu0 %v508, 256
        %v511 = vpop.permute.xlu0 %510
        %v512 = vlaneseq
        %v513 = vshrl.u32 %v512, 7
        %v514 = vsub.s32 1, %v513
        %v515 = vrot.slane %v483, %v514
        %517 = vbcast.lane.b32.xlu0 %v515, 256
        %v518 = vpop.permute.xlu0 %517
        %v519 = vlaneseq
        %v520 = vshrl.u32 %v519, 7
        %v521 = vsub.s32 2, %v520
        %v522 = vrot.slane %v483, %v521
        %524 = vbcast.lane.b32.xlu0 %v522, 256
        %v525 = vpop.permute.xlu0 %524
        %v526 = vlaneseq
        %v527 = vshrl.u32 %v526, 7
        %v528 = vsub.s32 3, %v527
        %v529 = vrot.slane %v483, %v528
        %531 = vbcast.lane.b32.xlu0 %v529, 256
        %v532 = vpop.permute.xlu0 %531
        %v533 = vlaneseq
        %v534 = vshrl.u32 %v533, 7
        %v535 = vsub.s32 4, %v534
        %v536 = vrot.slane %v483, %v535
        %538 = vbcast.lane.b32.xlu0 %v536, 256
        %v539 = vpop.permute.xlu0 %538
        %v540 = vlaneseq
        %v541 = vshrl.u32 %v540, 7
        %v542 = vsub.s32 5, %v541
        %v543 = vrot.slane %v483, %v542
        %545 = vbcast.lane.b32.xlu0 %v543, 256
        %v546 = vpop.permute.xlu0 %545
        %v547 = vlaneseq
        %v548 = vshrl.u32 %v547, 7
        %v549 = vsub.s32 6, %v548
        %v550 = vrot.slane %v483, %v549
        %552 = vbcast.lane.b32.xlu0 %v550, 256
        %v553 = vpop.permute.xlu0 %552
        %v554 = vlaneseq
        %v555 = vshrl.u32 %v554, 7
        %v556 = vsub.s32 7, %v555
        %v557 = vrot.slane %v483, %v556
        %559 = vbcast.lane.b32.xlu0 %v557, 256
        %v560 = vpop.permute.xlu0 %559
        %v561 = vmul.f32 %v511, %v350
        %v562 = vmul.f32 %v518, %v351
        %v563 = vmul.f32 %v525, %v352
        %v564 = vmul.f32 %v532, %v353
        %v565 = vmul.f32 %v539, %v354
        %v566 = vmul.f32 %v546, %v355
        %v567 = vmul.f32 %v553, %v356
        %v568 = vmul.f32 %v560, %v357
        %v569 = vsel %vm373, %v561, 0.0
        %v570 = vsel %vm373, %v562, 0.0
        %v571 = vadd.f32 %v569, %v570
        %v572 = vsel %vm373, %v563, 0.0
        %v573 = vadd.f32 %v571, %v572
        %v574 = vsel %vm373, %v564, 0.0
        %v575 = vadd.f32 %v573, %v574
        %v576 = vsel %vm373, %v565, 0.0
        %v577 = vadd.f32 %v575, %v576
        %v578 = vsel %vm373, %v566, 0.0
        %v579 = vadd.f32 %v577, %v578
        %v580 = vsel %vm373, %v567, 0.0
        %v581 = vadd.f32 %v579, %v580
        %v582 = vsel %vm373, %v568, 0.0
        %v583 = vadd.f32 %v581, %v582
        %v584 = vadd.f32 %v504, %v583
        %585 = vst.msk [vmem:[#allocation4] sm:$0xff] %vm373, %v584
        %586 = vst.msk [vmem:[#allocation2] sm:$0x1] %vm494, %v471
        %p587 = scmp.eq.s32.totalorder %s31, 2
        // Predicated region
        $region61: #{tpu_custom_call.1} parent=51 // pred_check
          %p588 = pneg %p587
        $region62: #{tpu_custom_call.1} parent=51 // pred_check_branch
          %590 = sbr.rel (%p588) target = $region64
        $region63: #{tpu_custom_call.1} parent=51 // pred_region
          %v591 = vld [vmem:[#allocation3] sm:$0x1]
          %v592 = vrcp.pop %v591
          %v593 = vld [vmem:[#allocation4] sm:$0xff]
          %v594 = vlaneseq
          %v595 = vshrl.u32 %v594, 7
          %v596 = vsub.s32 0, %v595
          %v597 = vrot.slane %v592, %v596
          %599 = vbcast.lane.b32.xlu0 %v597, 256
          %v600 = vpop.permute.xlu0 %599
          %v601 = vmul.f32 %v593, %v600
          %v602 = vld [vmem:[%s2] sm:$0xff]
          %v603 = vld [vmem:[%s2 + $0x8] sm:$0xff]
          %v604 = vld [vmem:[%s2 + $0x10] sm:$0xff]
          %v605 = vld [vmem:[%s2 + $0x18] sm:$0xff]
          %v606 = vld [vmem:[%s3] sm:$0x1]
          %v608 = vlaneseq
          %v609 = vshrl.u32 %v608, 7
          %v610 = vsub.s32 0, %v609
          %v611 = vrot.slane %v606, %v610
          %v614 = vsel %vm373, %v601, 0
          %616 = vmatprep.subr.mxu0 0.0
          %617 = vmatpush1.msra.mxu0 0.0
          %618 = vmatprep.subr.mxu0 0.0
          %619 = vmatpush1.msra.mxu0 0.0
          %620 = vmatprep.subr.mxu0 0.0
          %621 = vmatpush1.msra.mxu0 0.0
          %622 = vmatprep.subr.mxu0 0.0
          %623 = vmatpush1.msra.mxu0 0.0
          %624 = vmatprep.subr.mxu0 0.0
          %625 = vmatpush1.msra.mxu0 0.0
          %626 = vmatprep.subr.mxu0 0.0
          %627 = vmatpush1.msra.mxu0 0.0
          %628 = vmatprep.subr.mxu0 0.0
          %629 = vmatpush1.msra.mxu0 0.0
          %630 = vmatprep.subr.mxu0 0.0
          %631 = vmatpush1.msra.mxu0 0.0
          %632 = vmatprep.subr.mxu0 0.0
          %633 = vmatpush1.msra.mxu0 0.0
          %634 = vmatprep.subr.mxu0 0.0
          %635 = vmatpush1.msra.mxu0 0.0
          %636 = vmatprep.subr.mxu0 0.0
          %637 = vmatpush1.msra.mxu0 0.0
          %638 = vmatprep.subr.mxu0 0.0
          %639 = vmatpush1.msra.mxu0 0.0
          %640 = vmatprep.subr.mxu0 0.0
          %641 = vmatpush1.msra.mxu0 %v605
          %642 = vmatprep.subr.mxu0 0.0
          %643 = vmatpush1.msra.mxu0 %v604
          %644 = vmatprep.subr.mxu0 0.0
          %645 = vmatpush1.msra.mxu0 %v603
          %646 = vmatprep.subr.mxu0 0.0
          %647 = vmatpush1.msra.mxu0 %v602
          %648 = vmatprep.subr.mxu0 0.0
          %649 = vmatpush2.msra.mxu0 0.0
          %650 = vmatprep.subr.mxu0 0.0
          %651 = vmatpush2.msra.mxu0 0.0
          %652 = vmatprep.subr.mxu0 0.0
          %653 = vmatpush2.msra.mxu0 0.0
          %654 = vmatprep.subr.mxu0 0.0
          %655 = vmatpush2.msra.mxu0 0.0
          %656 = vmatprep.subr.mxu0 0.0
          %657 = vmatpush2.msra.mxu0 0.0
          %658 = vmatprep.subr.mxu0 0.0
          %659 = vmatpush2.msra.mxu0 0.0
          %660 = vmatprep.subr.mxu0 0.0
          %661 = vmatpush2.msra.mxu0 0.0
          %662 = vmatprep.subr.mxu0 0.0
          %663 = vmatpush2.msra.mxu0 0.0
          %664 = vmatprep.subr.mxu0 0.0
          %665 = vmatpush2.msra.mxu0 0.0
          %666 = vmatprep.subr.mxu0 0.0
          %667 = vmatpush2.msra.mxu0 0.0
          %668 = vmatprep.subr.mxu0 0.0
          %669 = vmatpush2.msra.mxu0 0.0
          %670 = vmatprep.subr.mxu0 0.0
          %671 = vmatpush2.msra.mxu0 0.0
          %672 = vmatprep.subr.mxu0 0.0
          %673 = vmatpush2.msra.mxu0 0.0
          %674 = vmatprep.subr.mxu0 0.0
          %675 = vmatpush2.msra.mxu0 0.0
          %676 = vmatprep.subr.mxu0 0.0
          %677 = vmatpush2.msra.mxu0 0.0
          %678 = vmatprep.subr.mxu0 0.0
          %679 = vmatpush2.msra.mxu0 0.0
          %680 = vmatprep.mubr.f32.mxu0 0.0
          %681 = vmatmul.mubr.f32.gmra.mxu0 %v614
          %v682 = vpop.f32.mrf.mxu0
          %v683 = vadd.f32 %v611, %v682
          %v684 = vpop.f32.mrf.mxu0
          %685 = vdwg.mxu0
          %vm686 = vcmp.gt.f32.partialorder %v683, 0.0
          %v687 = vmul.f32 %v683, 0.01
          %v688 = vsel %vm686, %v683, %v687
          %v689 = vld [vmem:[%s4] sm:$0xff]
          %v690 = vld [vmem:[%s4 + $0x8] sm:$0xff]
          %v691 = vld [vmem:[%s4 + $0x10] sm:$0xff]
          %v692 = vld [vmem:[%s4 + $0x18] sm:$0xff]
          %v693 = vld [vmem:[%s5] sm:$0x1]
          %v695 = vlaneseq
          %v696 = vshrl.u32 %v695, 7
          %v697 = vsub.s32 0, %v696
          %v698 = vrot.slane %v693, %v697
          %v701 = vsel %vm373, %v688, 0
          %703 = vmatprep.subr.mxu0 0.0
          %704 = vmatpush1.msra.mxu0 0.0
          %705 = vmatprep.subr.mxu0 0.0
          %706 = vmatpush1.msra.mxu0 0.0
          %707 = vmatprep.subr.mxu0 0.0
          %708 = vmatpush1.msra.mxu0 0.0
          %709 = vmatprep.subr.mxu0 0.0
          %710 = vmatpush1.msra.mxu0 0.0
          %711 = vmatprep.subr.mxu0 0.0
          %712 = vmatpush1.msra.mxu0 0.0
          %713 = vmatprep.subr.mxu0 0.0
          %714 = vmatpush1.msra.mxu0 0.0
          %715 = vmatprep.subr.mxu0 0.0
          %716 = vmatpush1.msra.mxu0 0.0
          %717 = vmatprep.subr.mxu0 0.0
          %718 = vmatpush1.msra.mxu0 0.0
          %719 = vmatprep.subr.mxu0 0.0
          %720 = vmatpush1.msra.mxu0 0.0
          %721 = vmatprep.subr.mxu0 0.0
          %722 = vmatpush1.msra.mxu0 0.0
          %723 = vmatprep.subr.mxu0 0.0
          %724 = vmatpush1.msra.mxu0 0.0
          %725 = vmatprep.subr.mxu0 0.0
          %726 = vmatpush1.msra.mxu0 0.0
          %727 = vmatprep.subr.mxu0 0.0
          %728 = vmatpush1.msra.mxu0 %v692
          %729 = vmatprep.subr.mxu0 0.0
          %730 = vmatpush1.msra.mxu0 %v691
          %731 = vmatprep.subr.mxu0 0.0
          %732 = vmatpush1.msra.mxu0 %v690
          %733 = vmatprep.subr.mxu0 0.0
          %734 = vmatpush1.msra.mxu0 %v689
          %735 = vmatprep.subr.mxu0 0.0
          %736 = vmatpush2.msra.mxu0 0.0
          %737 = vmatprep.subr.mxu0 0.0
          %738 = vmatpush2.msra.mxu0 0.0
          %739 = vmatprep.subr.mxu0 0.0
          %740 = vmatpush2.msra.mxu0 0.0
          %741 = vmatprep.subr.mxu0 0.0
          %742 = vmatpush2.msra.mxu0 0.0
          %743 = vmatprep.subr.mxu0 0.0
          %744 = vmatpush2.msra.mxu0 0.0
          %745 = vmatprep.subr.mxu0 0.0
          %746 = vmatpush2.msra.mxu0 0.0
          %747 = vmatprep.subr.mxu0 0.0
          %748 = vmatpush2.msra.mxu0 0.0
          %749 = vmatprep.subr.mxu0 0.0
          %750 = vmatpush2.msra.mxu0 0.0
          %751 = vmatprep.subr.mxu0 0.0
          %752 = vmatpush2.msra.mxu0 0.0
          %753 = vmatprep.subr.mxu0 0.0
          %754 = vmatpush2.msra.mxu0 0.0
          %755 = vmatprep.subr.mxu0 0.0
          %756 = vmatpush2.msra.mxu0 0.0
          %757 = vmatprep.subr.mxu0 0.0
          %758 = vmatpush2.msra.mxu0 0.0
          %759 = vmatprep.subr.mxu0 0.0
          %760 = vmatpush2.msra.mxu0 0.0
          %761 = vmatprep.subr.mxu0 0.0
          %762 = vmatpush2.msra.mxu0 0.0
          %763 = vmatprep.subr.mxu0 0.0
          %764 = vmatpush2.msra.mxu0 0.0
          %765 = vmatprep.subr.mxu0 0.0
          %766 = vmatpush2.msra.mxu0 0.0
          %767 = vmatprep.mubr.f32.mxu0 0.0
          %768 = vmatmul.mubr.f32.gmra.mxu0 %v701
          %v769 = vpop.f32.mrf.mxu0
          %v770 = vadd.f32 %v698, %v769
          %v771 = vpop.f32.mrf.mxu0
          %772 = vdwg.mxu0
          %vm773 = vcmp.gt.f32.partialorder %v770, 0.0
          %v774 = vmul.f32 %v770, 0.01
          %v775 = vsel %vm773, %v770, %v774
          %v776 = vld [vmem:[%s6] sm:$0x1]
          %v778 = vlaneseq
          %v779 = vshrl.u32 %v778, 7
          %v780 = vsub.s32 0, %v779
          %v781 = vrot.slane %v776, %v780
          %v783 = vmul.f32 %v775, %v781
          %vm784 = vcmask 130048
          %v785 = vsel %vm784, %v783, 0.0
          %786 = vadd.xlane.f32.xlu0 %v785
          %v787 = vpop.xlane.xlu0 %786
          %s788 = sld [smem:[#allocation5]]
          %v789 = vstv %s788
          %v790 = vadd.f32 %v787, %v789
          %v792 = vlaneseq
          %v793 = vshrl.u32 %v792, 7
          %v794 = vsub.s32 %v413, %v793
          %v795 = vrot.slane %v790, %v794
          %797 = vst.msk [vmem:[%s339] sm:$0x1] %vm494, %v795
        $region64: #{tpu_custom_call.1} parent=51 // pred_fallthru
          _
        %s798 = sand.u32 %s221, 1
        %s799 = scalar_lea.sflag [#allocation8], %s798
        %s800 = sand.u32 %s221, 1
        %s801 = scalar_lea.vmem [#allocation9], %s800
        // Predicated region
        $region65: #{tpu_custom_call.1} parent=51 // pred_check
          %p802 = pneg %p231
        $region66: #{tpu_custom_call.1} parent=51 // pred_check_branch
          %804 = sbr.rel (%p802) target = $region68
        $region67: #{tpu_custom_call.1} parent=51 // pred_region
          %s806 = ssub.s32 16, 16
          %807 = vsyncadd %s799, %s806
          %s808 = smul.addr %s30, 16
          %s809 = scalar_lea.hbm %s8, %s808
          %s811 = sshll.u32 %s801, 4
          %s812 = int_to_ptr.vmem [resolvable:$true] %s811
          %814 = dma.vmem_to_hbm [thread:$0]  %s812, 16, %s809, %s799
        $region68: #{tpu_custom_call.1} parent=51 // pred_fallthru
          _
      $region52: #{tpu_custom_call.1} parent=5 // pred_fallthru
        _
      %p815 = scmp.le.s32.totalorder 2, %s21
      // Predicated region
      $region69: #{tpu_custom_call.1} parent=5 // pred_check
        %p816 = pneg %p815
      $region70: #{tpu_custom_call.1} parent=5 // pred_check_branch
        %818 = sbr.rel (%p816) target = $region72
      $region71: #{tpu_custom_call.1} parent=5 // pred_region
        %s819 = ssub.s32 %s21, 2
        // Predicated region
        $region73: #{tpu_custom_call.1} parent=71 // pred_check
          %p820 = pneg %p237
        $region74: #{tpu_custom_call.1} parent=71 // pred_check_branch
          %822 = sbr.rel (%p820) target = $region76
        $region75: #{tpu_custom_call.1} parent=71 // pred_region
          %s823 = sand.u32 %s222, 1
          %s824 = scalar_lea.sflag [#allocation8], %s823
          %s825 = sand.u32 %s222, 1
          %s826 = scalar_lea.vmem [#allocation9], %s825
          %827 = dma.done %s824, 16
        $region76: #{tpu_custom_call.1} parent=71 // pred_fallthru
          _
      $region72: #{tpu_custom_call.1} parent=5 // pred_fallthru
        _
    $region6: #{tpu_custom_call.1} parent=1 // loop_footer
      %s25 = sadd.s32 1, %s21
    $region7: #{tpu_custom_call.1} parent=1 // loop_footer_branch
      %20 = sbr.rel target = $region3
    $region8: #{tpu_custom_call.1} parent=1 // loop_exit
      _
    %828 = vsyncpa [#allocation7], 1
    %s829 = scalar_lea.sflag [#allocation7], 1
    %830 = vsyncpa %s829, 1
    %831 = vsyncpa [#allocation8], 1
    %s832 = scalar_lea.sflag [#allocation8], 1
    %833 = vsyncpa %s832, 1

</llo_original>
